<compile_context>
chip_gen: v7x
topology: tpu7x:2x2x1
jax: 0.10.0
libtpu: 0.0.40
codegen_flags: <defaults>
</compile_context>

<pallas_src>
import functools
import math

import jax
import jax.numpy as jnp
from jax.experimental import pallas as pl
from jax.experimental.pallas import tpu as pltpu

LN_EPS = 1e-5  # PyTorch LayerNorm default


def _layernorm(y, gamma, beta):
    # one-pass variance: E[x^2] - mu^2  (single sweep over lanes)
    mu = jnp.mean(y, axis=-1, keepdims=True)
    mu2 = jnp.mean(y * y, axis=-1, keepdims=True)
    var = mu2 - mu * mu
    return (y - mu) * jax.lax.rsqrt(var + LN_EPS) * gamma + beta


def lim_kernel(x_ref, win_ref, bin_ref, wrest_ref, vec_ref, o_ref, *, nhead):
    # x_ref: (bn, T, C) block of the flattened (B*S, T, C) input, f32
    bn, T, C = x_ref.shape
    H = nhead
    dh = C // H
    rows = bn * T

    x = x_ref[...]                                     # (bn, T, C) f32
    xf = x.reshape(rows, C)                            # residual branch (f32)

    # packed bias / LayerNorm vectors: rows [bo, g1, bt1, b1, b2, g2, bt2, 0]
    vec = vec_ref[...]                                 # (8, C) f32
    bo, g1, bt1 = vec[0:1, :], vec[1:2, :], vec[2:3, :]
    b1, b2 = vec[3:4, :], vec[4:5, :]
    g2, bt2 = vec[5:6, :], vec[6:7, :]

    # packed weights: [wo | w1 | w2] along lanes, bf16
    wrest = wrest_ref[...]                             # (C, 3C) bf16
    wo = wrest[:, 0:C]
    w1 = wrest[:, C:2 * C]
    w2 = wrest[:, 2 * C:3 * C]

    # ---- fused QKV projection: one (rows, C) @ (C, 3C) MXU matmul ----------
    # (1/sqrt(dh) already folded into the Q columns of win/bin on the host)
    qkv = jnp.dot(xf.astype(jnp.bfloat16), win_ref[...],
                  preferred_element_type=jnp.float32) + bin_ref[...]   # (rows, 3C)

    # ---- attention with all heads stacked into the einsum batch dim ---------
    def split_heads(base):
        parts = [qkv[:, base + h * dh: base + (h + 1) * dh].reshape(bn, T, dh)
                 for h in range(H)]
        return jnp.concatenate(parts, axis=0).astype(jnp.bfloat16)     # (H*bn, T, dh)

    q = split_heads(0)
    k = split_heads(C)
    v = split_heads(2 * C)

    s = jnp.einsum('nqd,nkd->nqk', q, k,
                   preferred_element_type=jnp.float32)                 # (H*bn, T, T)
    s_max = jnp.max(s, axis=-1, keepdims=True)
    p = jnp.exp(s - s_max)
    p = p * pl.reciprocal(jnp.sum(p, axis=-1, keepdims=True), approx=True)
    ctx = jnp.einsum('nqk,nkd->nqd', p.astype(jnp.bfloat16), v,
                     preferred_element_type=jnp.float32)               # (H*bn, T, dh)
    # head-major reassembly along lanes (matches PyTorch MHA concat order)
    ctx = jnp.concatenate(
        [ctx[h * bn:(h + 1) * bn].reshape(rows, dh) for h in range(H)], axis=-1)

    # ---- output projection + residual + ln1 --------------------------------
    attn_out = jnp.dot(ctx.astype(jnp.bfloat16), wo,
                       preferred_element_type=jnp.float32) + bo
    h_l = _layernorm(attn_out + xf, g1, bt1)                           # (rows, C) f32

    # ---- MLP: Linear -> ReLU -> Linear --------------------------------------
    m = jnp.dot(h_l.astype(jnp.bfloat16), w1,
                preferred_element_type=jnp.float32) + b1
    m = jnp.maximum(m, 0.0)
    m = jnp.dot(m.astype(jnp.bfloat16), w2,
                preferred_element_type=jnp.float32) + b2

    # ---- residual + ln2 ------------------------------------------------------
    out = _layernorm(m + h_l, g2, bt2)
    o_ref[...] = out.reshape(bn, T, C)


def lim_pallas(x, params, nhead, block_rows=None):
    """x: (B, S, T, C) float32.  Returns (B, S, T, C)."""
    B, S, T, C = x.shape
    assert C % nhead == 0
    dh = C // nhead
    N = B * S
    # 'b s t c -> t (b s) c' is only a transpose for PyTorch's seq-first MHA;
    # attention over time per (b, s) row works directly on the (N, T, C) view.
    x2 = x.reshape(N, T, C)

    if block_rows is None:
        # target ~1024 GEMM rows (block_rows * T) per grid step (MXU M-feed),
        # but keep >= 2 grid steps so both TensorCores get work on v7x.
        target_rows = 1024
        block_rows = max(1, min(N, target_rows // max(T, 1)))
        if N >= 2:
            block_rows = min(block_rows, pl.cdiv(N, 2))
    grid_n = pl.cdiv(N, block_rows)
    n_pad = grid_n * block_rows
    if n_pad != N:
        # pad rows instead of shrinking block_rows for awkward N
        x2 = jnp.pad(x2, ((0, n_pad - N), (0, 0), (0, 0)))

    bf = jnp.bfloat16

    # fold 1/sqrt(dh) into the Q columns of the fused in-proj weight & bias
    scale = 1.0 / math.sqrt(dh)
    q_scale = jnp.concatenate([jnp.full((C,), scale, jnp.float32),
                               jnp.ones((2 * C,), jnp.float32)])
    w_in = (params["w_in"] * q_scale[None, :]).astype(bf)     # (C, 3C)
    b_in = params["b_in"] * q_scale[None, :]                  # (1, 3C) f32

    # fuse out_proj / mlp.W1 / mlp.W2 into a single weight stream
    w_rest = jnp.concatenate([params["wo"], params["w1"], params["w2"]],
                             axis=1).astype(bf)               # (C, 3C)

    # pack all (1, C) bias / LN vectors into one (8, C) array
    vecs = jnp.concatenate([params["bo"], params["g1"], params["bt1"],
                            params["b1"], params["b2"], params["g2"],
                            params["bt2"], jnp.zeros((1, C), jnp.float32)],
                           axis=0)                            # (8, C) f32

    row_spec = pl.BlockSpec((block_rows, T, C), lambda i: (i, 0, 0))
    full2 = lambda shape: pl.BlockSpec(shape, lambda i: (0, 0))

    kernel = functools.partial(lim_kernel, nhead=nhead)

    out2 = pl.pallas_call(
        kernel,
        out_shape=jax.ShapeDtypeStruct((n_pad, T, C), jnp.float32),
        grid_spec=pltpu.PrefetchScalarGridSpec(
            num_scalar_prefetch=0,
            grid=(grid_n,),
            in_specs=[
                row_spec,                        # input block (also the residual)
                full2((C, 3 * C)),               # fused QKV weight (bf16, q-scaled)
                full2((1, 3 * C)),               # fused QKV bias (f32, q-scaled)
                full2((C, 3 * C)),               # fused [wo | w1 | w2] (bf16)
                full2((8, C)),                   # packed bias / LN vectors (f32)
            ],
            out_specs=row_spec,
        ),
        compiler_params=pltpu.CompilerParams(
            dimension_semantics=("parallel",),
            vmem_limit_bytes=48 * 1024 * 1024),
    )(x2, w_in, b_in, w_rest, vecs)

    return out2[:N].reshape(B, S, T, C)


def lim_reference(x, params, nhead):
    """Pure-JAX f32 reference matching the PyTorch LIM forward (eval mode)."""
    B, S, T, C = x.shape
    N = B * S
    H = nhead
    dh = C // H
    x2 = x.reshape(N, T, C)

    qkv = x2 @ params["w_in"] + params["b_in"][0]                 # (N, T, 3C)
    q, k, v = qkv[..., :C], qkv[..., C:2 * C], qkv[..., 2 * C:]

    def heads(m):
        return m.reshape(N, T, H, dh).transpose(0, 2, 1, 3)       # (N, H, T, dh)

    qh, kh, vh = heads(q), heads(k), heads(v)
    s = jnp.einsum('nhqd,nhkd->nhqk', qh, kh) / jnp.sqrt(jnp.float32(dh))
    p = jax.nn.softmax(s, axis=-1)
    ctx = jnp.einsum('nhqk,nhkd->nhqd', p, vh)
    ctx = ctx.transpose(0, 2, 1, 3).reshape(N, T, C)

    attn_out = ctx @ params["wo"] + params["bo"][0]
    h = _layernorm(attn_out + x2, params["g1"][0], params["bt1"][0])
    m = jnp.maximum(h @ params["w1"] + params["b1"][0], 0.0)
    m = m @ params["w2"] + params["b2"][0]
    out = _layernorm(m + h, params["g2"][0], params["bt2"][0])
    return out.reshape(B, S, T, C)


def make_params(key, C):
    ks = jax.random.split(key, 12)
    sc = 0.1
    return {
        # fused in_proj stored transposed: (C_in, 3*C_out) so qkv = x @ W + b
        # (PyTorch in_proj_weight is (3C, C); columns ordered [q | k | v])
        "w_in": sc * jax.random.normal(ks[0], (C, 3 * C), jnp.float32),
        "b_in": sc * jax.random.normal(ks[1], (1, 3 * C), jnp.float32),
        "wo": sc * jax.random.normal(ks[2], (C, C), jnp.float32),
        "bo": sc * jax.random.normal(ks[3], (1, C), jnp.float32),
        "g1": 1.0 + sc * jax.random.normal(ks[4], (1, C), jnp.float32),
        "bt1": sc * jax.random.normal(ks[5], (1, C), jnp.float32),
        "w1": sc * jax.random.normal(ks[6], (C, C), jnp.float32),
        "b1": sc * jax.random.normal(ks[7], (1, C), jnp.float32),
        "w2": sc * jax.random.normal(ks[8], (C, C), jnp.float32),
        "b2": sc * jax.random.normal(ks[9], (1, C), jnp.float32),
        "g2": 1.0 + sc * jax.random.normal(ks[10], (1, C), jnp.float32),
        "bt2": sc * jax.random.normal(ks[11], (1, C), jnp.float32),
    }


if __name__ == "__main__":
    key = jax.random.PRNGKey(0)
    k_x, k_p = jax.random.split(key)

    # LIM: u_s_l is (batch, speakers, time, d_model); attention runs over time
    # independently per (batch, speaker).  d_model=128 keeps channels lane-dense.
    B, S, T, C, H = 2, 4, 8, 128, 4

    x = jax.random.normal(k_x, (B, S, T, C), jnp.float32)
    params = make_params(k_p, C)

    out = lim_pallas(x, params, nhead=H)
    out = jax.block_until_ready(out)

    ref = lim_reference(x, params, nhead=H)
    assert out.shape == (B, S, T, C)
    if not bool(jnp.allclose(out, ref, atol=5e-2, rtol=5e-2)):
        err = float(jnp.max(jnp.abs(out - ref)))
        raise AssertionError(
            f"Pallas LIM kernel does not match JAX reference (max |err| = {err})")

    print("KERNEL_OK")
</pallas_src>

<mosaic_0001>
module attributes {stable_mosaic.version = 11 : i64} {
  func.func @lim_kernel(%arg0: i32, %arg1: memref<4x8x128xf32, #tpu.memory_space<vmem>>, %arg2: memref<128x384xbf16, #tpu.memory_space<vmem>>, %arg3: memref<1x384xf32, #tpu.memory_space<vmem>>, %arg4: memref<128x384xbf16, #tpu.memory_space<vmem>>, %arg5: memref<8x128xf32, #tpu.memory_space<vmem>>, %arg6: memref<4x8x128xf32, #tpu.memory_space<vmem>>) attributes {dimension_semantics = [#tpu.dimension_semantics<parallel>], iteration_bounds = array<i64: 2>, scalar_prefetch = 0 : i64, scratch_operands = 0 : i64, tpu.core_type = #tpu.core_type<tc>, window_params = [{transform_indices = @transform_0, window_bounds = array<i64: 4, 8, 128>}, {pipeline_mode = #tpu.pipeline_mode<synchronous>, transform_indices = @transform_1, window_bounds = array<i64: 128, 384>}, {pipeline_mode = #tpu.pipeline_mode<synchronous>, transform_indices = @transform_2, window_bounds = array<i64: 1, 384>}, {pipeline_mode = #tpu.pipeline_mode<synchronous>, transform_indices = @transform_3, window_bounds = array<i64: 128, 384>}, {pipeline_mode = #tpu.pipeline_mode<synchronous>, transform_indices = @transform_4, window_bounds = array<i64: 8, 128>}, {transform_indices = @transform_5, window_bounds = array<i64: 4, 8, 128>}]} {
    %c0 = arith.constant 0 : index
    %c0_0 = arith.constant 0 : index
    %c0_1 = arith.constant 0 : index
    %0 = vector.load %arg1[%c0, %c0_0, %c0_1] : memref<4x8x128xf32, #tpu.memory_space<vmem>>, vector<4x8x128xf32>
    %1 = vector.shape_cast %0 : vector<4x8x128xf32> to vector<32x128xf32>
    %c0_2 = arith.constant 0 : index
    %c0_3 = arith.constant 0 : index
    %2 = vector.load %arg5[%c0_2, %c0_3] : memref<8x128xf32, #tpu.memory_space<vmem>>, vector<8x128xf32>
    %3 = vector.extract_strided_slice %2 {offsets = [0, 0], sizes = [1, 128], strides = [1, 1]} : vector<8x128xf32> to vector<1x128xf32>
    %4 = vector.extract_strided_slice %2 {offsets = [1, 0], sizes = [1, 128], strides = [1, 1]} : vector<8x128xf32> to vector<1x128xf32>
    %5 = vector.extract_strided_slice %2 {offsets = [2, 0], sizes = [1, 128], strides = [1, 1]} : vector<8x128xf32> to vector<1x128xf32>
    %6 = vector.extract_strided_slice %2 {offsets = [3, 0], sizes = [1, 128], strides = [1, 1]} : vector<8x128xf32> to vector<1x128xf32>
    %7 = vector.extract_strided_slice %2 {offsets = [4, 0], sizes = [1, 128], strides = [1, 1]} : vector<8x128xf32> to vector<1x128xf32>
    %8 = vector.extract_strided_slice %2 {offsets = [5, 0], sizes = [1, 128], strides = [1, 1]} : vector<8x128xf32> to vector<1x128xf32>
    %9 = vector.extract_strided_slice %2 {offsets = [6, 0], sizes = [1, 128], strides = [1, 1]} : vector<8x128xf32> to vector<1x128xf32>
    %c0_4 = arith.constant 0 : index
    %c0_5 = arith.constant 0 : index
    %10 = vector.load %arg4[%c0_4, %c0_5] : memref<128x384xbf16, #tpu.memory_space<vmem>>, vector<128x384xbf16>
    %11 = vector.extract_strided_slice %10 {offsets = [0, 0], sizes = [128, 128], strides = [1, 1]} : vector<128x384xbf16> to vector<128x128xbf16>
    %12 = vector.extract_strided_slice %10 {offsets = [0, 128], sizes = [128, 128], strides = [1, 1]} : vector<128x384xbf16> to vector<128x128xbf16>
    %13 = vector.extract_strided_slice %10 {offsets = [0, 256], sizes = [128, 128], strides = [1, 1]} : vector<128x384xbf16> to vector<128x128xbf16>
    %14 = arith.truncf %1 : vector<32x128xf32> to vector<32x128xbf16>
    %c0_6 = arith.constant 0 : index
    %c0_7 = arith.constant 0 : index
    %15 = vector.load %arg2[%c0_6, %c0_7] : memref<128x384xbf16, #tpu.memory_space<vmem>>, vector<128x384xbf16>
    %cst = arith.constant dense<0.000000e+00> : vector<32x384xf32>
    %16 = tpu.matmul %14, %15, %cst {dimension_numbers = #tpu.dot_dimension_numbers<[1], [0], [0], [1], [0, 0, 1, 1], [], []>} : vector<32x128xbf16>, vector<128x384xbf16>, vector<32x384xf32> -> vector<32x384xf32>
    %c0_8 = arith.constant 0 : index
    %c0_9 = arith.constant 0 : index
    %17 = vector.load %arg3[%c0_8, %c0_9] : memref<1x384xf32, #tpu.memory_space<vmem>>, vector<1x384xf32>
    %18 = vector.broadcast %17 : vector<1x384xf32> to vector<32x384xf32>
    %19 = arith.addf %16, %18 : vector<32x384xf32>
    %20 = vector.extract_strided_slice %19 {offsets = [0, 0], sizes = [32, 32], strides = [1, 1]} : vector<32x384xf32> to vector<32x32xf32>
    %21 = vector.shape_cast %20 : vector<32x32xf32> to vector<4x8x32xf32>
    %22 = vector.extract_strided_slice %19 {offsets = [0, 32], sizes = [32, 32], strides = [1, 1]} : vector<32x384xf32> to vector<32x32xf32>
    %23 = vector.shape_cast %22 : vector<32x32xf32> to vector<4x8x32xf32>
    %24 = vector.extract_strided_slice %19 {offsets = [0, 64], sizes = [32, 32], strides = [1, 1]} : vector<32x384xf32> to vector<32x32xf32>
    %25 = vector.shape_cast %24 : vector<32x32xf32> to vector<4x8x32xf32>
    %26 = vector.extract_strided_slice %19 {offsets = [0, 96], sizes = [32, 32], strides = [1, 1]} : vector<32x384xf32> to vector<32x32xf32>
    %27 = vector.shape_cast %26 : vector<32x32xf32> to vector<4x8x32xf32>
    %28 = tpu.concatenate %21, %23, %25, %27 in 0 : vector<4x8x32xf32>, vector<4x8x32xf32>, vector<4x8x32xf32>, vector<4x8x32xf32> -> vector<16x8x32xf32>
    %29 = arith.truncf %28 : vector<16x8x32xf32> to vector<16x8x32xbf16>
    %30 = vector.extract_strided_slice %19 {offsets = [0, 128], sizes = [32, 32], strides = [1, 1]} : vector<32x384xf32> to vector<32x32xf32>
    %31 = vector.shape_cast %30 : vector<32x32xf32> to vector<4x8x32xf32>
    %32 = vector.extract_strided_slice %19 {offsets = [0, 160], sizes = [32, 32], strides = [1, 1]} : vector<32x384xf32> to vector<32x32xf32>
    %33 = vector.shape_cast %32 : vector<32x32xf32> to vector<4x8x32xf32>
    %34 = vector.extract_strided_slice %19 {offsets = [0, 192], sizes = [32, 32], strides = [1, 1]} : vector<32x384xf32> to vector<32x32xf32>
    %35 = vector.shape_cast %34 : vector<32x32xf32> to vector<4x8x32xf32>
    %36 = vector.extract_strided_slice %19 {offsets = [0, 224], sizes = [32, 32], strides = [1, 1]} : vector<32x384xf32> to vector<32x32xf32>
    %37 = vector.shape_cast %36 : vector<32x32xf32> to vector<4x8x32xf32>
    %38 = tpu.concatenate %31, %33, %35, %37 in 0 : vector<4x8x32xf32>, vector<4x8x32xf32>, vector<4x8x32xf32>, vector<4x8x32xf32> -> vector<16x8x32xf32>
    %39 = arith.truncf %38 : vector<16x8x32xf32> to vector<16x8x32xbf16>
    %40 = vector.extract_strided_slice %19 {offsets = [0, 256], sizes = [32, 32], strides = [1, 1]} : vector<32x384xf32> to vector<32x32xf32>
    %41 = vector.shape_cast %40 : vector<32x32xf32> to vector<4x8x32xf32>
    %42 = vector.extract_strided_slice %19 {offsets = [0, 288], sizes = [32, 32], strides = [1, 1]} : vector<32x384xf32> to vector<32x32xf32>
    %43 = vector.shape_cast %42 : vector<32x32xf32> to vector<4x8x32xf32>
    %44 = vector.extract_strided_slice %19 {offsets = [0, 320], sizes = [32, 32], strides = [1, 1]} : vector<32x384xf32> to vector<32x32xf32>
    %45 = vector.shape_cast %44 : vector<32x32xf32> to vector<4x8x32xf32>
    %46 = vector.extract_strided_slice %19 {offsets = [0, 352], sizes = [32, 32], strides = [1, 1]} : vector<32x384xf32> to vector<32x32xf32>
    %47 = vector.shape_cast %46 : vector<32x32xf32> to vector<4x8x32xf32>
    %48 = tpu.concatenate %41, %43, %45, %47 in 0 : vector<4x8x32xf32>, vector<4x8x32xf32>, vector<4x8x32xf32>, vector<4x8x32xf32> -> vector<16x8x32xf32>
    %49 = arith.truncf %48 : vector<16x8x32xf32> to vector<16x8x32xbf16>
    "tpu.trace_start"() <{level = 10 : i32, message = "nqd,nkd->nqk"}> : () -> ()
    %cst_10 = arith.constant dense<0.000000e+00> : vector<16x8x8xf32>
    %50 = tpu.matmul %29, %39, %cst_10 {dimension_numbers = #tpu.dot_dimension_numbers<[2], [2], [1], [1], [0, 0, 0, 1, 1, 1], [0], [0]>} : vector<16x8x32xbf16>, vector<16x8x32xbf16>, vector<16x8x8xf32> -> vector<16x8x8xf32>
    "tpu.trace_stop"() : () -> ()
    %cst_11 = arith.constant dense<0xFF800000> : vector<16x8xf32>
    %51 = vector.multi_reduction <maximumf>, %50, %cst_11 [2] : vector<16x8x8xf32> to vector<16x8xf32>
    %52 = vector.shape_cast %51 : vector<16x8xf32> to vector<16x8x1xf32>
    %53 = vector.broadcast %52 : vector<16x8x1xf32> to vector<16x8x8xf32>
    %54 = arith.subf %50, %53 : vector<16x8x8xf32>
    %55 = math.exp %54 : vector<16x8x8xf32>
    %cst_12 = arith.constant dense<0.000000e+00> : vector<16x8xf32>
    %56 = vector.multi_reduction <add>, %55, %cst_12 [2] : vector<16x8x8xf32> to vector<16x8xf32>
    %57 = vector.shape_cast %56 : vector<16x8xf32> to vector<16x8x1xf32>
    %58 = tpu.reciprocal %57 {approx = true} : vector<16x8x1xf32> -> vector<16x8x1xf32>
    %59 = vector.broadcast %58 : vector<16x8x1xf32> to vector<16x8x8xf32>
    %60 = arith.mulf %55, %59 : vector<16x8x8xf32>
    %61 = arith.truncf %60 : vector<16x8x8xf32> to vector<16x8x8xbf16>
    "tpu.trace_start"() <{level = 10 : i32, message = "nqk,nkd->nqd"}> : () -> ()
    %cst_13 = arith.constant dense<0.000000e+00> : vector<16x8x32xf32>
    %62 = tpu.matmul %61, %49, %cst_13 {dimension_numbers = #tpu.dot_dimension_numbers<[2], [1], [1], [2], [0, 0, 0, 1, 1, 2], [0], [0]>} : vector<16x8x8xbf16>, vector<16x8x32xbf16>, vector<16x8x32xf32> -> vector<16x8x32xf32>
    "tpu.trace_stop"() : () -> ()
    %63 = vector.extract_strided_slice %62 {offsets = [0, 0, 0], sizes = [4, 8, 32], strides = [1, 1, 1]} : vector<16x8x32xf32> to vector<4x8x32xf32>
    %64 = vector.shape_cast %63 : vector<4x8x32xf32> to vector<32x32xf32>
    %65 = vector.extract_strided_slice %62 {offsets = [4, 0, 0], sizes = [4, 8, 32], strides = [1, 1, 1]} : vector<16x8x32xf32> to vector<4x8x32xf32>
    %66 = vector.shape_cast %65 : vector<4x8x32xf32> to vector<32x32xf32>
    %67 = vector.extract_strided_slice %62 {offsets = [8, 0, 0], sizes = [4, 8, 32], strides = [1, 1, 1]} : vector<16x8x32xf32> to vector<4x8x32xf32>
    %68 = vector.shape_cast %67 : vector<4x8x32xf32> to vector<32x32xf32>
    %69 = vector.extract_strided_slice %62 {offsets = [12, 0, 0], sizes = [4, 8, 32], strides = [1, 1, 1]} : vector<16x8x32xf32> to vector<4x8x32xf32>
    %70 = vector.shape_cast %69 : vector<4x8x32xf32> to vector<32x32xf32>
    %71 = tpu.concatenate %64, %66, %68, %70 in 1 : vector<32x32xf32>, vector<32x32xf32>, vector<32x32xf32>, vector<32x32xf32> -> vector<32x128xf32>
    %72 = arith.truncf %71 : vector<32x128xf32> to vector<32x128xbf16>
    %cst_14 = arith.constant dense<0.000000e+00> : vector<32x128xf32>
    %73 = tpu.matmul %72, %11, %cst_14 {dimension_numbers = #tpu.dot_dimension_numbers<[1], [0], [0], [1], [0, 0, 1, 1], [], []>} : vector<32x128xbf16>, vector<128x128xbf16>, vector<32x128xf32> -> vector<32x128xf32>
    %74 = vector.broadcast %3 : vector<1x128xf32> to vector<32x128xf32>
    %75 = arith.addf %73, %74 : vector<32x128xf32>
    %76 = arith.addf %75, %1 : vector<32x128xf32>
    %cst_15 = arith.constant dense<0.000000e+00> : vector<32xf32>
    %77 = vector.multi_reduction <add>, %76, %cst_15 [1] : vector<32x128xf32> to vector<32xf32>
    %78 = vector.shape_cast %77 : vector<32xf32> to vector<32x1xf32>
    %cst_16 = arith.constant 1.280000e+02 : f32
    %79 = vector.broadcast %cst_16 : f32 to vector<32x1xf32>
    %80 = arith.divf %78, %79 : vector<32x1xf32>
    %81 = arith.mulf %76, %76 : vector<32x128xf32>
    %cst_17 = arith.constant dense<0.000000e+00> : vector<32xf32>
    %82 = vector.multi_reduction <add>, %81, %cst_17 [1] : vector<32x128xf32> to vector<32xf32>
    %83 = vector.shape_cast %82 : vector<32xf32> to vector<32x1xf32>
    %cst_18 = arith.constant 1.280000e+02 : f32
    %84 = vector.broadcast %cst_18 : f32 to vector<32x1xf32>
    %85 = arith.divf %83, %84 : vector<32x1xf32>
    %86 = arith.mulf %80, %80 : vector<32x1xf32>
    %87 = arith.subf %85, %86 : vector<32x1xf32>
    %88 = vector.broadcast %80 : vector<32x1xf32> to vector<32x128xf32>
    %89 = arith.subf %76, %88 : vector<32x128xf32>
    %cst_19 = arith.constant 9.99999974E-6 : f32
    %90 = vector.broadcast %cst_19 : f32 to vector<32x1xf32>
    %91 = arith.addf %87, %90 : vector<32x1xf32>
    %92 = math.rsqrt %91 : vector<32x1xf32>
    %93 = vector.broadcast %92 : vector<32x1xf32> to vector<32x128xf32>
    %94 = arith.mulf %89, %93 : vector<32x128xf32>
    %95 = vector.broadcast %4 : vector<1x128xf32> to vector<32x128xf32>
    %96 = arith.mulf %94, %95 : vector<32x128xf32>
    %97 = vector.broadcast %5 : vector<1x128xf32> to vector<32x128xf32>
    %98 = arith.addf %96, %97 : vector<32x128xf32>
    %99 = arith.truncf %98 : vector<32x128xf32> to vector<32x128xbf16>
    %cst_20 = arith.constant dense<0.000000e+00> : vector<32x128xf32>
    %100 = tpu.matmul %99, %12, %cst_20 {dimension_numbers = #tpu.dot_dimension_numbers<[1], [0], [0], [1], [0, 0, 1, 1], [], []>} : vector<32x128xbf16>, vector<128x128xbf16>, vector<32x128xf32> -> vector<32x128xf32>
    %101 = vector.broadcast %6 : vector<1x128xf32> to vector<32x128xf32>
    %102 = arith.addf %100, %101 : vector<32x128xf32>
    %cst_21 = arith.constant 0.000000e+00 : f32
    %103 = vector.broadcast %cst_21 : f32 to vector<32x128xf32>
    %104 = arith.maximumf %102, %103 : vector<32x128xf32>
    %105 = arith.truncf %104 : vector<32x128xf32> to vector<32x128xbf16>
    %cst_22 = arith.constant dense<0.000000e+00> : vector<32x128xf32>
    %106 = tpu.matmul %105, %13, %cst_22 {dimension_numbers = #tpu.dot_dimension_numbers<[1], [0], [0], [1], [0, 0, 1, 1], [], []>} : vector<32x128xbf16>, vector<128x128xbf16>, vector<32x128xf32> -> vector<32x128xf32>
    %107 = vector.broadcast %7 : vector<1x128xf32> to vector<32x128xf32>
    %108 = arith.addf %106, %107 : vector<32x128xf32>
    %109 = arith.addf %108, %98 : vector<32x128xf32>
    %cst_23 = arith.constant dense<0.000000e+00> : vector<32xf32>
    %110 = vector.multi_reduction <add>, %109, %cst_23 [1] : vector<32x128xf32> to vector<32xf32>
    %111 = vector.shape_cast %110 : vector<32xf32> to vector<32x1xf32>
    %cst_24 = arith.constant 1.280000e+02 : f32
    %112 = vector.broadcast %cst_24 : f32 to vector<32x1xf32>
    %113 = arith.divf %111, %112 : vector<32x1xf32>
    %114 = arith.mulf %109, %109 : vector<32x128xf32>
    %cst_25 = arith.constant dense<0.000000e+00> : vector<32xf32>
    %115 = vector.multi_reduction <add>, %114, %cst_25 [1] : vector<32x128xf32> to vector<32xf32>
    %116 = vector.shape_cast %115 : vector<32xf32> to vector<32x1xf32>
    %cst_26 = arith.constant 1.280000e+02 : f32
    %117 = vector.broadcast %cst_26 : f32 to vector<32x1xf32>
    %118 = arith.divf %116, %117 : vector<32x1xf32>
    %119 = arith.mulf %113, %113 : vector<32x1xf32>
    %120 = arith.subf %118, %119 : vector<32x1xf32>
    %121 = vector.broadcast %113 : vector<32x1xf32> to vector<32x128xf32>
    %122 = arith.subf %109, %121 : vector<32x128xf32>
    %cst_27 = arith.constant 9.99999974E-6 : f32
    %123 = vector.broadcast %cst_27 : f32 to vector<32x1xf32>
    %124 = arith.addf %120, %123 : vector<32x1xf32>
    %125 = math.rsqrt %124 : vector<32x1xf32>
    %126 = vector.broadcast %125 : vector<32x1xf32> to vector<32x128xf32>
    %127 = arith.mulf %122, %126 : vector<32x128xf32>
    %128 = vector.broadcast %8 : vector<1x128xf32> to vector<32x128xf32>
    %129 = arith.mulf %127, %128 : vector<32x128xf32>
    %130 = vector.broadcast %9 : vector<1x128xf32> to vector<32x128xf32>
    %131 = arith.addf %129, %130 : vector<32x128xf32>
    %132 = vector.shape_cast %131 : vector<32x128xf32> to vector<4x8x128xf32>
    %c0_28 = arith.constant 0 : index
    %c0_29 = arith.constant 0 : index
    %c0_30 = arith.constant 0 : index
    %133 = vector.load %arg6[%c0_28, %c0_29, %c0_30] : memref<4x8x128xf32, #tpu.memory_space<vmem>>, vector<4x8x128xf32>
    tpu.vector_store %arg6[%c0_28, %c0_29, %c0_30], %132 {strides = array<i32>} : memref<4x8x128xf32, #tpu.memory_space<vmem>>, vector<4x8x128xf32>,
    return
  }
  func.func @transform_0(%arg0: i32) -> (i32, i32, i32) {
    %c0_i32 = arith.constant 0 : i32
    %c0_i32_0 = arith.constant 0 : i32
    %c0_i32_1 = arith.constant 0 : i32
    return %arg0, %c0_i32, %c0_i32_0 : i32, i32, i32
  }
  func.func @transform_1(%arg0: i32) -> (i32, i32) {
    %c0_i32 = arith.constant 0 : i32
    %c0_i32_0 = arith.constant 0 : i32
    %c0_i32_1 = arith.constant 0 : i32
    return %c0_i32, %c0_i32_0 : i32, i32
  }
  func.func @transform_2(%arg0: i32) -> (i32, i32) {
    %c0_i32 = arith.constant 0 : i32
    %c0_i32_0 = arith.constant 0 : i32
    %c0_i32_1 = arith.constant 0 : i32
    return %c0_i32, %c0_i32_0 : i32, i32
  }
  func.func @transform_3(%arg0: i32) -> (i32, i32) {
    %c0_i32 = arith.constant 0 : i32
    %c0_i32_0 = arith.constant 0 : i32
    %c0_i32_1 = arith.constant 0 : i32
    return %c0_i32, %c0_i32_0 : i32, i32
  }
  func.func @transform_4(%arg0: i32) -> (i32, i32) {
    %c0_i32 = arith.constant 0 : i32
    %c0_i32_0 = arith.constant 0 : i32
    %c0_i32_1 = arith.constant 0 : i32
    return %c0_i32, %c0_i32_0 : i32, i32
  }
  func.func @transform_5(%arg0: i32) -> (i32, i32, i32) {
    %c0_i32 = arith.constant 0 : i32
    %c0_i32_0 = arith.constant 0 : i32
    %c0_i32_1 = arith.constant 0 : i32
    return %arg0, %c0_i32, %c0_i32_0 : i32, i32, i32
  }
}

</mosaic_0001>

<llo_original>
// kernel: tpu_custom_call.1
$region0: #{tpu_custom_call.1}
  #allocation0 [shape = 'u32[]', space=smem, size = 0x4, offset = 0x4, fixed_abs, tag = 'smem constant byte address 0x4 - core index']
  #allocation1 [shape = 'u32[144,128]{1,0:T(1,128)}', space=vmem, size = 0x12000, scoped, tag = 'internal scratch']
  %s0 = inlined_call_operand.hbm [shape: f32[8,8,128], index: 0, kind: input, shape index: {}]
  %s1 = inlined_call_operand.hbm [shape: bf16[128,384], index: 1, kind: input, shape index: {}]
  %s2 = inlined_call_operand.vmem [shape: f32[1,384], index: 2, kind: input, shape index: {}]
  %s3 = inlined_call_operand.hbm [shape: bf16[128,384], index: 3, kind: input, shape index: {}]
  %s4 = inlined_call_operand.vmem [shape: f32[8,128], index: 4, kind: input, shape index: {}]
  %s5 = inlined_call_operand.hbm [shape: f32[8,8,128], index: 5, kind: output, shape index: {}]
  %s6 = sld [smem:[#allocation0]]
  $region65: #{tpu_custom_call.1} parent=0
    _
  %s8 = ssub.s32 1, %s6
  %s9 = scalar_select 0, %s8, %s6
  $region1: #{tpu_custom_call.1} parent=0
    #allocation2 [shape = 'u8[32768]{0}', space=vmem, size = 0x8000, scoped, tag = 'input window, operand 0']
    #allocation3 [shape = 's32[2]{0}', space=sflag, size = 0x8, scoped, tag = 'scoped memory for tpu_custom_call.1']
    #allocation4 [shape = 's32[2]{0}', space=sflag, size = 0x8, scoped, tag = 'scoped memory for tpu_custom_call.1']
    #allocation5 [shape = 'u8[98304]{0}', space=vmem, size = 0x18000, scoped, tag = 'input window, operand 1, single buffered']
    #allocation6 [shape = 's32[1]{0}', space=sflag, size = 0x4, scoped, tag = 'scoped memory for tpu_custom_call.1']
    #allocation7 [shape = 'u8[98304]{0}', space=vmem, size = 0x18000, scoped, tag = 'input window, operand 3, single buffered']
    #allocation8 [shape = 'u8[32768]{0}', space=vmem, size = 0x8000, scoped, tag = 'output window, operand 0']
    %10 = vsyncpa [#allocation3], 0
    %s11 = scalar_lea.sflag [#allocation3], 1
    %12 = vsyncpa %s11, 0
    %13 = vsyncpa [#allocation6], 0
    %14 = vsyncpa [#allocation4], 0
    %s15 = scalar_lea.sflag [#allocation4], 1
    %16 = vsyncpa %s15, 0
    loop: start=0, step=1, limit=4
    $region2: #{tpu_custom_call.1} parent=1 // loop_pre_header
      _
    $region3: #{tpu_custom_call.1} parent=1 // loop_header
      %s18 = sphi 0, %s22
      %p19 = scmp.ge.s32.totalorder %s18, 4
      %s28 = sphi 0, %s30
      %s31 = sphi 0, %s28
      %s32 = sphi 0, %s31
      %s48 = sphi 0, %s32
      %s52 = sphi 0, %s52
      %s54 = sphi 0, %s52
      %s55 = sphi 0, %s54
      %s69 = sphi 0, %s55
      %s73 = sphi 0, %s73
      %s75 = sphi 0, %s73
      %s76 = sphi 0, %s75
      %s90 = sphi 0, %s76
      %s94 = sphi 0, %s94
      %s96 = sphi 0, %s94
      %s97 = sphi 0, %s96
      %s111 = sphi 0, %s97
      %s115 = sphi 0, %s115
      %s117 = sphi 0, %s115
      %s118 = sphi 0, %s117
      %s132 = sphi 0, %s118
      %s138 = sphi 0, %s140
      %s141 = sphi 0, %s138
      %s142 = sphi 0, %s141
      %s158 = sphi 0, %s142
    $region4: #{tpu_custom_call.1} parent=1 // loop_header_branch
      %21 = sbr.rel (%p19) target = $region8
    $region5: #{tpu_custom_call.1} parent=1 // loop_body
      %s23 = ssub.s32 %s18, 1
      %s24 = ssub.s32 %s18, 2
      %s25 = sadd.s32 %s18, 1
      %s26 = ssub.s32 %s18, %s25
      %p27 = scmp.eq.s32.totalorder %s26, 0
      %s29 = sadd.s32 %s28, 1
      %s30 = scalar_select %p27, %s28, %s29
      %p33 = pneg %p27
      %p34 = scmp.eq.s32.totalorder %s18, 1
      %p35 = por %p33, %p34
      %p36 = scmp.ne.s32.totalorder %s28, %s31
      %p37 = scmp.eq.s32.totalorder %s18, 0
      %p38 = por %p36, %p37
      %p39 = scmp.ne.s32.totalorder %s28, %s31
      %p40 = scmp.eq.s32.totalorder %s23, 1
      %p41 = por %p39, %p40
      %p42 = scmp.ne.s32.totalorder %s31, %s32
      %p43 = scmp.eq.s32.totalorder %s23, 0
      %p44 = por %p42, %p43
      %p45 = scmp.ne.s32.totalorder %s31, %s32
      %p46 = scmp.eq.s32.totalorder %s24, 1
      %p47 = por %p45, %p46
      %p49 = scmp.ne.s32.totalorder %s32, %s48
      %p50 = scmp.eq.s32.totalorder %s24, 0
      %p51 = por %p49, %p50
      %s53 = sadd.s32 %s52, 1
      %p56 = scmp.eq.s32.totalorder %s18, 1
      %p57 = scmp.ne.s32.totalorder %s52, %s54
      %p58 = scmp.eq.s32.totalorder %s18, 0
      %p59 = por %p57, %p58
      %p60 = scmp.ne.s32.totalorder %s52, %s54
      %p61 = scmp.eq.s32.totalorder %s23, 1
      %p62 = por %p60, %p61
      %p63 = scmp.ne.s32.totalorder %s54, %s55
      %p64 = scmp.eq.s32.totalorder %s23, 0
      %p65 = por %p63, %p64
      %p66 = scmp.ne.s32.totalorder %s54, %s55
      %p67 = scmp.eq.s32.totalorder %s24, 1
      %p68 = por %p66, %p67
      %p70 = scmp.ne.s32.totalorder %s55, %s69
      %p71 = scmp.eq.s32.totalorder %s24, 0
      %p72 = por %p70, %p71
      %s74 = sadd.s32 %s73, 1
      %p77 = scmp.eq.s32.totalorder %s18, 1
      %p78 = scmp.ne.s32.totalorder %s73, %s75
      %p79 = scmp.eq.s32.totalorder %s18, 0
      %p80 = por %p78, %p79
      %p81 = scmp.ne.s32.totalorder %s73, %s75
      %p82 = scmp.eq.s32.totalorder %s23, 1
      %p83 = por %p81, %p82
      %p84 = scmp.ne.s32.totalorder %s75, %s76
      %p85 = scmp.eq.s32.totalorder %s23, 0
      %p86 = por %p84, %p85
      %p87 = scmp.ne.s32.totalorder %s75, %s76
      %p88 = scmp.eq.s32.totalorder %s24, 1
      %p89 = por %p87, %p88
      %p91 = scmp.ne.s32.totalorder %s76, %s90
      %p92 = scmp.eq.s32.totalorder %s24, 0
      %p93 = por %p91, %p92
      %s95 = sadd.s32 %s94, 1
      %p98 = scmp.eq.s32.totalorder %s18, 1
      %p99 = scmp.ne.s32.totalorder %s94, %s96
      %p100 = scmp.eq.s32.totalorder %s18, 0
      %p101 = por %p99, %p100
      %p102 = scmp.ne.s32.totalorder %s94, %s96
      %p103 = scmp.eq.s32.totalorder %s23, 1
      %p104 = por %p102, %p103
      %p105 = scmp.ne.s32.totalorder %s96, %s97
      %p106 = scmp.eq.s32.totalorder %s23, 0
      %p107 = por %p105, %p106
      %p108 = scmp.ne.s32.totalorder %s96, %s97
      %p109 = scmp.eq.s32.totalorder %s24, 1
      %p110 = por %p108, %p109
      %p112 = scmp.ne.s32.totalorder %s97, %s111
      %p113 = scmp.eq.s32.totalorder %s24, 0
      %p114 = por %p112, %p113
      %s116 = sadd.s32 %s115, 1
      %p119 = scmp.eq.s32.totalorder %s18, 1
      %p120 = scmp.ne.s32.totalorder %s115, %s117
      %p121 = scmp.eq.s32.totalorder %s18, 0
      %p122 = por %p120, %p121
      %p123 = scmp.ne.s32.totalorder %s115, %s117
      %p124 = scmp.eq.s32.totalorder %s23, 1
      %p125 = por %p123, %p124
      %p126 = scmp.ne.s32.totalorder %s117, %s118
      %p127 = scmp.eq.s32.totalorder %s23, 0
      %p128 = por %p126, %p127
      %p129 = scmp.ne.s32.totalorder %s117, %s118
      %p130 = scmp.eq.s32.totalorder %s24, 1
      %p131 = por %p129, %p130
      %p133 = scmp.ne.s32.totalorder %s118, %s132
      %p134 = scmp.eq.s32.totalorder %s24, 0
      %p135 = por %p133, %p134
      %s136 = ssub.s32 %s18, %s25
      %p137 = scmp.eq.s32.totalorder %s136, 0
      %s139 = sadd.s32 %s138, 1
      %s140 = scalar_select %p137, %s138, %s139
      %p143 = pneg %p137
      %p144 = scmp.eq.s32.totalorder %s18, 1
      %p145 = por %p143, %p144
      %p146 = scmp.ne.s32.totalorder %s138, %s141
      %p147 = scmp.eq.s32.totalorder %s18, 0
      %p148 = por %p146, %p147
      %p149 = scmp.ne.s32.totalorder %s138, %s141
      %p150 = scmp.eq.s32.totalorder %s23, 1
      %p151 = por %p149, %p150
      %p152 = scmp.ne.s32.totalorder %s141, %s142
      %p153 = scmp.eq.s32.totalorder %s23, 0
      %p154 = por %p152, %p153
      %p155 = scmp.ne.s32.totalorder %s141, %s142
      %p156 = scmp.eq.s32.totalorder %s24, 1
      %p157 = por %p155, %p156
      %p159 = scmp.ne.s32.totalorder %s142, %s158
      %p160 = scmp.eq.s32.totalorder %s24, 0
      %p161 = por %p159, %p160
      %p162 = scmp.le.s32.totalorder 1, %s18
      %p163 = scmp.lt.s32.totalorder %s18, 3
      %p164 = pnand %p162, %p163
      %p165 = pneg %p164
      // Predicated region
      $region9: #{tpu_custom_call.1} parent=5 // pred_check
        _
      $region10: #{tpu_custom_call.1} parent=5 // pred_check_branch
        %167 = sbr.rel (%p164) target = $region12
      $region11: #{tpu_custom_call.1} parent=5 // pred_region
        %s168 = ssub.s32 %s18, 1
        // Predicated region
        $region13: #{tpu_custom_call.1} parent=11 // pred_check
          %p169 = pneg %p65
        $region14: #{tpu_custom_call.1} parent=11 // pred_check_branch
          %171 = sbr.rel (%p169) target = $region16
        $region15: #{tpu_custom_call.1} parent=11 // pred_region
          %s173 = ssub.s32 3072, 3072
          %174 = vsyncadd [#allocation6], %s173
          %s175 = sshll.u32 [#allocation5], 4
          %s176 = int_to_ptr.vmem [resolvable:$true] %s175
          %181 = dma.hbm_to_vmem [thread:$0]  %s1, 3072, %s176, [#allocation6], 192, 192, 12
        $region16: #{tpu_custom_call.1} parent=11 // pred_fallthru
          _
        // Predicated region
        $region17: #{tpu_custom_call.1} parent=11 // pred_check
          %p182 = pneg %p86
        $region18: #{tpu_custom_call.1} parent=11 // pred_check_branch
          %184 = sbr.rel (%p182) target = $region20
        $region19: #{tpu_custom_call.1} parent=11 // pred_region
          _
        $region20: #{tpu_custom_call.1} parent=11 // pred_fallthru
          _
        // Predicated region
        $region21: #{tpu_custom_call.1} parent=11 // pred_check
          %p185 = pneg %p107
        $region22: #{tpu_custom_call.1} parent=11 // pred_check_branch
          %187 = sbr.rel (%p185) target = $region24
        $region23: #{tpu_custom_call.1} parent=11 // pred_region
          %s189 = ssub.s32 3072, 3072
          %190 = vsyncadd [#allocation6], %s189
          %s191 = sshll.u32 [#allocation7], 4
          %s192 = int_to_ptr.vmem [resolvable:$true] %s191
          %197 = dma.hbm_to_vmem [thread:$0]  %s3, 3072, %s192, [#allocation6], 192, 192, 12
        $region24: #{tpu_custom_call.1} parent=11 // pred_fallthru
          _
        // Predicated region
        $region25: #{tpu_custom_call.1} parent=11 // pred_check
          %p198 = pneg %p128
        $region26: #{tpu_custom_call.1} parent=11 // pred_check_branch
          %200 = sbr.rel (%p198) target = $region28
        $region27: #{tpu_custom_call.1} parent=11 // pred_region
          _
        $region28: #{tpu_custom_call.1} parent=11 // pred_fallthru
          _
      $region12: #{tpu_custom_call.1} parent=5 // pred_fallthru
        _
      %p201 = scmp.lt.s32.totalorder %s18, 2
      // Predicated region
      $region29: #{tpu_custom_call.1} parent=5 // pred_check
        %p202 = pneg %p201
      $region30: #{tpu_custom_call.1} parent=5 // pred_check_branch
        %204 = sbr.rel (%p202) target = $region32
      $region31: #{tpu_custom_call.1} parent=5 // pred_region
        // Predicated region
        $region33: #{tpu_custom_call.1} parent=31 // pred_check
          %p205 = pneg %p38
        $region34: #{tpu_custom_call.1} parent=31 // pred_check_branch
          %207 = sbr.rel (%p205) target = $region36
        $region35: #{tpu_custom_call.1} parent=31 // pred_region
          %s208 = sand.u32 %s28, 1
          %s209 = scalar_lea.sflag [#allocation3], %s208
          %s210 = sand.u32 %s28, 1
          %s211 = smul.addr %s210, 32
          %s212 = scalar_lea.vmem [#allocation2], %s211
          %s213 = smul.u32 4, %s18
          %s215 = ssub.s32 512, 512
          %216 = vsyncadd %s209, %s215
          %s217 = smul.addr %s213, 128
          %s218 = scalar_lea.hbm %s0, %s217
          %s219 = sshll.u32 %s212, 4
          %s220 = int_to_ptr.vmem [resolvable:$true] %s219
          %225 = dma.hbm_to_vmem [thread:$0]  %s218, 512, %s220, %s209, 128, 128, 8
        $region36: #{tpu_custom_call.1} parent=31 // pred_fallthru
          _
      $region32: #{tpu_custom_call.1} parent=5 // pred_fallthru
        _
      %p226 = scmp.le.s32.totalorder 1, %s18
      %p227 = scmp.lt.s32.totalorder %s18, 3
      %p228 = pnand %p226, %p227
      %p229 = pneg %p228
      // Predicated region
      $region37: #{tpu_custom_call.1} parent=5 // pred_check
        _
      $region38: #{tpu_custom_call.1} parent=5 // pred_check_branch
        %231 = sbr.rel (%p228) target = $region40
      $region39: #{tpu_custom_call.1} parent=5 // pred_region
        %s232 = ssub.s32 %s18, 1
        %s233 = sand.u32 %s31, 1
        %s234 = scalar_lea.sflag [#allocation3], %s233
        %s235 = sand.u32 %s31, 1
        %s236 = smul.addr %s235, 32
        %s237 = scalar_lea.vmem [#allocation2], %s236
        // Predicated region
        $region41: #{tpu_custom_call.1} parent=39 // pred_check
          %p238 = pneg %p44
        $region42: #{tpu_custom_call.1} parent=39 // pred_check_branch
          %240 = sbr.rel (%p238) target = $region44
        $region43: #{tpu_custom_call.1} parent=39 // pred_region
          %241 = dma.done %s234, 512
        $region44: #{tpu_custom_call.1} parent=39 // pred_fallthru
          _
        // Predicated region
        $region45: #{tpu_custom_call.1} parent=39 // pred_check
          %p242 = pneg %p65
        $region46: #{tpu_custom_call.1} parent=39 // pred_check_branch
          %244 = sbr.rel (%p242) target = $region48
        $region47: #{tpu_custom_call.1} parent=39 // pred_region
          %245 = dma.done [#allocation6], 3072
        $region48: #{tpu_custom_call.1} parent=39 // pred_fallthru
          _
        // Predicated region
        $region49: #{tpu_custom_call.1} parent=39 // pred_check
          %p246 = pneg %p107
        $region50: #{tpu_custom_call.1} parent=39 // pred_check_branch
          %248 = sbr.rel (%p246) target = $region52
        $region51: #{tpu_custom_call.1} parent=39 // pred_region
          %249 = dma.done [#allocation6], 3072
        $region52: #{tpu_custom_call.1} parent=39 // pred_fallthru
          _
        %s250 = sand.u32 %s31, 1
        %s251 = scalar_lea.sflag [#allocation3], %s250
        %s252 = sand.u32 %s31, 1
        %s253 = smul.addr %s252, 32
        %s254 = scalar_lea.vmem [#allocation2], %s253
        %p255 = pneg %p44
        %p256 = pneg %p41
        %p257 = pneg %p65
        %p258 = pneg %p62
        %p259 = pneg %p86
        %p260 = pneg %p83
        %p261 = pneg %p107
        %p262 = pneg %p104
        %p263 = pneg %p128
        %p264 = pneg %p125
        %p265 = pneg %p154
        %p266 = pneg %p151
        %s267 = sand.u32 %s141, 1
        %s268 = scalar_lea.sflag [#allocation4], %s267
        %s269 = sand.u32 %s141, 1
        %s270 = smul.addr %s269, 32
        %s271 = scalar_lea.vmem [#allocation8], %s270
        %s272 = smul.u32 4, %s23
        %s273 = smul.u32 4, %s23
        %v275 = vld [vmem:[%s237] sm:$0xff]
        %v276 = vld [vmem:[%s237 + $0x8] sm:$0xff]
        %v277 = vld [vmem:[%s237 + $0x10] sm:$0xff]
        %v278 = vld [vmem:[%s237 + $0x18] sm:$0xff]
        %v279 = vld [vmem:[%s4] sm:$0xff]
        %v280 = vld [vmem:[#allocation7] sm:$0xff]
        %v281 = vld [vmem:[#allocation7 + $0x8] sm:$0xf]
        %v282 = vld [vmem:[#allocation7 + $0xc] sm:$0xff]
        %v283 = vld [vmem:[#allocation7 + $0x14] sm:$0xf]
        %v284 = vld [vmem:[#allocation7 + $0x18] sm:$0xff]
        %v285 = vld [vmem:[#allocation7 + $0x20] sm:$0xf]
        %v286 = vld [vmem:[#allocation7 + $0x24] sm:$0xff]
        %v287 = vld [vmem:[#allocation7 + $0x2c] sm:$0xf]
        %v288 = vld [vmem:[#allocation7 + $0x30] sm:$0xff]
        %v289 = vld [vmem:[#allocation7 + $0x38] sm:$0xf]
        %v290 = vld [vmem:[#allocation7 + $0x3c] sm:$0xff]
        %v291 = vld [vmem:[#allocation7 + $0x44] sm:$0xf]
        %v292 = vld [vmem:[#allocation7 + $0x48] sm:$0xff]
        %v293 = vld [vmem:[#allocation7 + $0x50] sm:$0xf]
        %v294 = vld [vmem:[#allocation7 + $0x54] sm:$0xff]
        %v295 = vld [vmem:[#allocation7 + $0x5c] sm:$0xf]
        %v296 = vld [vmem:[#allocation7 + $0x60] sm:$0xff]
        %v297 = vld [vmem:[#allocation7 + $0x68] sm:$0xf]
        %v298 = vld [vmem:[#allocation7 + $0x6c] sm:$0xff]
        %v299 = vld [vmem:[#allocation7 + $0x74] sm:$0xf]
        %v300 = vld [vmem:[#allocation7 + $0x78] sm:$0xff]
        %v301 = vld [vmem:[#allocation7 + $0x80] sm:$0xf]
        %v302 = vld [vmem:[#allocation7 + $0x84] sm:$0xff]
        %v303 = vld [vmem:[#allocation7 + $0x8c] sm:$0xf]
        %v304 = vld [vmem:[#allocation7 + $0x90] sm:$0xff]
        %v305 = vld [vmem:[#allocation7 + $0x98] sm:$0xf]
        %v306 = vld [vmem:[#allocation7 + $0x9c] sm:$0xff]
        %v307 = vld [vmem:[#allocation7 + $0xa4] sm:$0xf]
        %v308 = vld [vmem:[#allocation7 + $0xa8] sm:$0xff]
        %v309 = vld [vmem:[#allocation7 + $0xb0] sm:$0xf]
        %v310 = vld [vmem:[#allocation7 + $0xb4] sm:$0xff]
        %v311 = vld [vmem:[#allocation7 + $0xbc] sm:$0xf]
        %v312 = vpack.c.bf16 %v276, %v275
        %v313 = vpack.c.bf16 %v278, %v277
        %v314 = vld [vmem:[#allocation5] sm:$0xff]
        %v315 = vld [vmem:[#allocation5 + $0x8] sm:$0xf]
        %v316 = vld [vmem:[#allocation5 + $0xc] sm:$0xff]
        %v317 = vld [vmem:[#allocation5 + $0x14] sm:$0xf]
        %v318 = vld [vmem:[#allocation5 + $0x18] sm:$0xff]
        %v319 = vld [vmem:[#allocation5 + $0x20] sm:$0xf]
        %v320 = vld [vmem:[#allocation5 + $0x24] sm:$0xff]
        %v321 = vld [vmem:[#allocation5 + $0x2c] sm:$0xf]
        %v322 = vld [vmem:[#allocation5 + $0x30] sm:$0xff]
        %v323 = vld [vmem:[#allocation5 + $0x38] sm:$0xf]
        %v324 = vld [vmem:[#allocation5 + $0x3c] sm:$0xff]
        %v325 = vld [vmem:[#allocation5 + $0x44] sm:$0xf]
        %v326 = vld [vmem:[#allocation5 + $0x48] sm:$0xff]
        %v327 = vld [vmem:[#allocation5 + $0x50] sm:$0xf]
        %v328 = vld [vmem:[#allocation5 + $0x54] sm:$0xff]
        %v329 = vld [vmem:[#allocation5 + $0x5c] sm:$0xf]
        %v330 = vld [vmem:[#allocation5 + $0x60] sm:$0xff]
        %v331 = vld [vmem:[#allocation5 + $0x68] sm:$0xf]
        %v332 = vld [vmem:[#allocation5 + $0x6c] sm:$0xff]
        %v333 = vld [vmem:[#allocation5 + $0x74] sm:$0xf]
        %v334 = vld [vmem:[#allocation5 + $0x78] sm:$0xff]
        %v335 = vld [vmem:[#allocation5 + $0x80] sm:$0xf]
        %v336 = vld [vmem:[#allocation5 + $0x84] sm:$0xff]
        %v337 = vld [vmem:[#allocation5 + $0x8c] sm:$0xf]
        %v338 = vld [vmem:[#allocation5 + $0x90] sm:$0xff]
        %v339 = vld [vmem:[#allocation5 + $0x98] sm:$0xf]
        %v340 = vld [vmem:[#allocation5 + $0x9c] sm:$0xff]
        %v341 = vld [vmem:[#allocation5 + $0xa4] sm:$0xf]
        %v342 = vld [vmem:[#allocation5 + $0xa8] sm:$0xff]
        %v343 = vld [vmem:[#allocation5 + $0xb0] sm:$0xf]
        %v344 = vld [vmem:[#allocation5 + $0xb4] sm:$0xff]
        %v345 = vld [vmem:[#allocation5 + $0xbc] sm:$0xf]
        %v346 = vld [vmem:[%s2] sm:$0x7]
        %v348 = vlaneseq
        %v349 = vshrl.u32 %v348, 7
        %v350 = vsub.s32 0, %v349
        %v351 = vrot.slane %v346, %v350
        %v352 = vlaneseq
        %v353 = vshrl.u32 %v352, 7
        %v354 = vsub.s32 1, %v353
        %v355 = vrot.slane %v346, %v354
        %v356 = vlaneseq
        %v357 = vshrl.u32 %v356, 7
        %v358 = vsub.s32 2, %v357
        %v359 = vrot.slane %v346, %v358
        %v395 = vunpack.c.l.b16 %v314
        %v396 = vunpack.c.h.b16 %v314
        %v397 = vunpack.c.l.b16 %v315
        %v398 = vunpack.c.l.b16 %v316
        %v399 = vunpack.c.h.b16 %v316
        %v400 = vunpack.c.l.b16 %v317
        %v401 = vunpack.c.l.b16 %v318
        %v402 = vunpack.c.h.b16 %v318
        %v403 = vunpack.c.l.b16 %v319
        %v404 = vunpack.c.l.b16 %v320
        %v405 = vunpack.c.h.b16 %v320
        %v406 = vunpack.c.l.b16 %v321
        %v407 = vunpack.c.l.b16 %v322
        %v408 = vunpack.c.h.b16 %v322
        %v409 = vunpack.c.l.b16 %v323
        %v410 = vunpack.c.l.b16 %v324
        %v411 = vunpack.c.h.b16 %v324
        %v412 = vunpack.c.l.b16 %v325
        %v413 = vunpack.c.l.b16 %v326
        %v414 = vunpack.c.h.b16 %v326
        %v415 = vunpack.c.l.b16 %v327
        %v416 = vunpack.c.l.b16 %v328
        %v417 = vunpack.c.h.b16 %v328
        %v418 = vunpack.c.l.b16 %v329
        %v419 = vunpack.c.l.b16 %v330
        %v420 = vunpack.c.h.b16 %v330
        %v421 = vunpack.c.l.b16 %v331
        %v422 = vunpack.c.l.b16 %v332
        %v423 = vunpack.c.h.b16 %v332
        %v424 = vunpack.c.l.b16 %v333
        %v425 = vunpack.c.l.b16 %v334
        %v426 = vunpack.c.h.b16 %v334
        %v427 = vunpack.c.l.b16 %v335
        %v428 = vunpack.c.l.b16 %v336
        %v429 = vunpack.c.h.b16 %v336
        %v430 = vunpack.c.l.b16 %v337
        %v431 = vunpack.c.l.b16 %v338
        %v432 = vunpack.c.h.b16 %v338
        %v433 = vunpack.c.l.b16 %v339
        %v434 = vunpack.c.l.b16 %v340
        %v435 = vunpack.c.h.b16 %v340
        %v436 = vunpack.c.l.b16 %v341
        %v437 = vunpack.c.l.b16 %v342
        %v438 = vunpack.c.h.b16 %v342
        %v439 = vunpack.c.l.b16 %v343
        %v440 = vunpack.c.l.b16 %v344
        %v441 = vunpack.c.h.b16 %v344
        %v442 = vunpack.c.l.b16 %v345
        %v443 = vpack.c.b16 %v398, %v395
        %v444 = vpack.c.b16 %v399, %v396
        %v445 = vpack.c.b16 %v400, %v397
        %v446 = vpack.c.b16 %v404, %v401
        %v447 = vpack.c.b16 %v405, %v402
        %v448 = vpack.c.b16 %v406, %v403
        %v449 = vpack.c.b16 %v410, %v407
        %v450 = vpack.c.b16 %v411, %v408
        %v451 = vpack.c.b16 %v412, %v409
        %v452 = vpack.c.b16 %v416, %v413
        %v453 = vpack.c.b16 %v417, %v414
        %v454 = vpack.c.b16 %v418, %v415
        %v455 = vpack.c.b16 %v422, %v419
        %v456 = vpack.c.b16 %v423, %v420
        %v457 = vpack.c.b16 %v424, %v421
        %v458 = vpack.c.b16 %v428, %v425
        %v459 = vpack.c.b16 %v429, %v426
        %v460 = vpack.c.b16 %v430, %v427
        %v461 = vpack.c.b16 %v434, %v431
        %v462 = vpack.c.b16 %v435, %v432
        %v463 = vpack.c.b16 %v436, %v433
        %v464 = vpack.c.b16 %v440, %v437
        %v465 = vpack.c.b16 %v441, %v438
        %v466 = vpack.c.b16 %v442, %v439
        %491 = vmatprep.subr.bf16.mxu0 %v444
        %492 = vmatpush1.bf16.msra.mxu0 %v443
        %493 = vmatprep.subr.bf16.mxu0 %v447
        %494 = vmatpush1.bf16.msra.mxu0 %v446
        %495 = vmatprep.subr.bf16.mxu0 %v450
        %496 = vmatpush1.bf16.msra.mxu0 %v449
        %497 = vmatprep.subr.bf16.mxu0 %v453
        %498 = vmatpush1.bf16.msra.mxu0 %v452
        %499 = vmatprep.subr.bf16.mxu0 %v456
        %500 = vmatpush1.bf16.msra.mxu0 %v455
        %501 = vmatprep.subr.bf16.mxu0 %v459
        %502 = vmatpush1.bf16.msra.mxu0 %v458
        %503 = vmatprep.subr.bf16.mxu0 %v462
        %504 = vmatpush1.bf16.msra.mxu0 %v461
        %505 = vmatprep.subr.bf16.mxu0 %v465
        %506 = vmatpush1.bf16.msra.mxu0 %v464
        %507 = vmatprep.subr.bf16.mxu0 0
        %508 = vmatpush1.bf16.msra.mxu0 0
        %509 = vmatprep.subr.bf16.mxu0 0
        %510 = vmatpush1.bf16.msra.mxu0 0
        %511 = vmatprep.subr.bf16.mxu0 0
        %512 = vmatpush1.bf16.msra.mxu0 0
        %513 = vmatprep.subr.bf16.mxu0 0
        %514 = vmatpush1.bf16.msra.mxu0 0
        %515 = vmatprep.subr.bf16.mxu0 0
        %516 = vmatpush1.bf16.msra.mxu0 0
        %517 = vmatprep.subr.bf16.mxu0 0
        %518 = vmatpush1.bf16.msra.mxu0 0
        %519 = vmatprep.subr.bf16.mxu0 0
        %520 = vmatpush1.bf16.msra.mxu0 0
        %521 = vmatprep.subr.bf16.mxu0 0
        %522 = vmatpush1.bf16.msra.mxu0 0
        %523 = vmatprep.mubr.bf16.mxu0 0
        %524 = vmatmul.mubr.bf16.gmra.mrb[0].mxu0 %v312
        %v525 = vpop.f32.mrb[0].mxu0
        %v526 = vadd.f32 %v351, %v525
        %v527 = vpop.f32.mrb[0].mxu0
        %v528 = vadd.f32 %v355, %v527
        %v529 = vpop.f32.mrb[0].mxu0
        %v530 = vadd.f32 %v351, %v529
        %v531 = vpop.f32.mrb[0].mxu0
        %v532 = vadd.f32 %v355, %v531
        %533 = vmatprep.mubr.bf16.mxu0 0
        %534 = vmatmul.mubr.bf16.gmra.mrb[0].mxu0 %v313
        %v535 = vpop.f32.mrb[0].mxu0
        %v536 = vadd.f32 %v351, %v535
        %v537 = vpop.f32.mrb[0].mxu0
        %v538 = vadd.f32 %v355, %v537
        %v539 = vpop.f32.mrb[0].mxu0
        %v540 = vadd.f32 %v351, %v539
        %v541 = vpop.f32.mrb[0].mxu0
        %v542 = vadd.f32 %v355, %v541
        %543 = vdwg.mxu0
        %544 = vmatprep.subr.bf16.mxu0 0
        %545 = vmatpush1.bf16.msra.mxu0 %v445
        %546 = vmatprep.subr.bf16.mxu0 0
        %547 = vmatpush1.bf16.msra.mxu0 %v448
        %548 = vmatprep.subr.bf16.mxu0 0
        %549 = vmatpush1.bf16.msra.mxu0 %v451
        %550 = vmatprep.subr.bf16.mxu0 0
        %551 = vmatpush1.bf16.msra.mxu0 %v454
        %552 = vmatprep.subr.bf16.mxu0 0
        %553 = vmatpush1.bf16.msra.mxu0 %v457
        %554 = vmatprep.subr.bf16.mxu0 0
        %555 = vmatpush1.bf16.msra.mxu0 %v460
        %556 = vmatprep.subr.bf16.mxu0 0
        %557 = vmatpush1.bf16.msra.mxu0 %v463
        %558 = vmatprep.subr.bf16.mxu0 0
        %559 = vmatpush1.bf16.msra.mxu0 %v466
        %560 = vmatprep.subr.bf16.mxu0 0
        %561 = vmatpush1.bf16.msra.mxu0 0
        %562 = vmatprep.subr.bf16.mxu0 0
        %563 = vmatpush1.bf16.msra.mxu0 0
        %564 = vmatprep.subr.bf16.mxu0 0
        %565 = vmatpush1.bf16.msra.mxu0 0
        %566 = vmatprep.subr.bf16.mxu0 0
        %567 = vmatpush1.bf16.msra.mxu0 0
        %568 = vmatprep.subr.bf16.mxu0 0
        %569 = vmatpush1.bf16.msra.mxu0 0
        %570 = vmatprep.subr.bf16.mxu0 0
        %571 = vmatpush1.bf16.msra.mxu0 0
        %572 = vmatprep.subr.bf16.mxu0 0
        %573 = vmatpush1.bf16.msra.mxu0 0
        %574 = vmatprep.subr.bf16.mxu0 0
        %575 = vmatpush1.bf16.msra.mxu0 0
        %576 = vmatprep.mubr.bf16.mxu0 0
        %577 = vmatmul.mubr.bf16.gmra.mrb[0].mxu0 %v312
        %v578 = vpop.f32.mrb[0].mxu0
        %v579 = vadd.f32 %v359, %v578
        %v580 = vpop.f32.mrb[0].mxu0
        %v581 = vpop.f32.mrb[0].mxu0
        %v582 = vadd.f32 %v359, %v581
        %v583 = vpop.f32.mrb[0].mxu0
        %584 = vmatprep.mubr.bf16.mxu0 0
        %585 = vmatmul.mubr.bf16.gmra.mrb[0].mxu0 %v313
        %v586 = vpop.f32.mrb[0].mxu0
        %v587 = vadd.f32 %v359, %v586
        %v588 = vpop.f32.mrb[0].mxu0
        %v589 = vpop.f32.mrb[0].mxu0
        %v590 = vadd.f32 %v359, %v589
        %v591 = vpop.f32.mrb[0].mxu0
        %592 = vdwg.mxu0
        %597 = vrot.lane.b32.xlu0 %v526, 96
        %v598 = vpop.permute.xlu0 %597
        %599 = vrot.lane.b32.xlu0 %v530, 96
        %v600 = vpop.permute.xlu0 %599
        %601 = vrot.lane.b32.xlu0 %v536, 96
        %v602 = vpop.permute.xlu0 %601
        %603 = vrot.lane.b32.xlu0 %v540, 96
        %v604 = vpop.permute.xlu0 %603
        %609 = vrot.lane.b32.xlu0 %v526, 64
        %v610 = vpop.permute.xlu0 %609
        %611 = vrot.lane.b32.xlu0 %v530, 64
        %v612 = vpop.permute.xlu0 %611
        %613 = vrot.lane.b32.xlu0 %v536, 64
        %v614 = vpop.permute.xlu0 %613
        %615 = vrot.lane.b32.xlu0 %v540, 64
        %v616 = vpop.permute.xlu0 %615
        %621 = vrot.lane.b32.xlu0 %v526, 32
        %v622 = vpop.permute.xlu0 %621
        %623 = vrot.lane.b32.xlu0 %v530, 32
        %v624 = vpop.permute.xlu0 %623
        %625 = vrot.lane.b32.xlu0 %v536, 32
        %v626 = vpop.permute.xlu0 %625
        %627 = vrot.lane.b32.xlu0 %v540, 32
        %v628 = vpop.permute.xlu0 %627
        %v633 = vpack.c.bf16 %v526, %v526
        %v634 = vpack.c.bf16 %v530, %v530
        %v635 = vpack.c.bf16 %v536, %v536
        %v636 = vpack.c.bf16 %v540, %v540
        %v637 = vpack.c.bf16 %v598, %v598
        %v638 = vpack.c.bf16 %v600, %v600
        %v639 = vpack.c.bf16 %v602, %v602
        %v640 = vpack.c.bf16 %v604, %v604
        %v641 = vpack.c.bf16 %v610, %v610
        %v642 = vpack.c.bf16 %v612, %v612
        %v643 = vpack.c.bf16 %v614, %v614
        %v644 = vpack.c.bf16 %v616, %v616
        %v645 = vpack.c.bf16 %v622, %v622
        %v646 = vpack.c.bf16 %v624, %v624
        %v647 = vpack.c.bf16 %v626, %v626
        %v648 = vpack.c.bf16 %v628, %v628
        %653 = vrot.lane.b32.xlu0 %v528, 96
        %v654 = vpop.permute.xlu0 %653
        %655 = vrot.lane.b32.xlu0 %v532, 96
        %v656 = vpop.permute.xlu0 %655
        %657 = vrot.lane.b32.xlu0 %v538, 96
        %v658 = vpop.permute.xlu0 %657
        %659 = vrot.lane.b32.xlu0 %v542, 96
        %v660 = vpop.permute.xlu0 %659
        %665 = vrot.lane.b32.xlu0 %v528, 64
        %v666 = vpop.permute.xlu0 %665
        %667 = vrot.lane.b32.xlu0 %v532, 64
        %v668 = vpop.permute.xlu0 %667
        %669 = vrot.lane.b32.xlu0 %v538, 64
        %v670 = vpop.permute.xlu0 %669
        %671 = vrot.lane.b32.xlu0 %v542, 64
        %v672 = vpop.permute.xlu0 %671
        %677 = vrot.lane.b32.xlu0 %v528, 32
        %v678 = vpop.permute.xlu0 %677
        %679 = vrot.lane.b32.xlu0 %v532, 32
        %v680 = vpop.permute.xlu0 %679
        %681 = vrot.lane.b32.xlu0 %v538, 32
        %v682 = vpop.permute.xlu0 %681
        %683 = vrot.lane.b32.xlu0 %v542, 32
        %v684 = vpop.permute.xlu0 %683
        %v689 = vpack.c.bf16 %v528, %v528
        %v690 = vpack.c.bf16 %v532, %v532
        %v691 = vpack.c.bf16 %v538, %v538
        %v692 = vpack.c.bf16 %v542, %v542
        %v693 = vpack.c.bf16 %v654, %v654
        %v694 = vpack.c.bf16 %v656, %v656
        %v695 = vpack.c.bf16 %v658, %v658
        %v696 = vpack.c.bf16 %v660, %v660
        %v697 = vpack.c.bf16 %v666, %v666
        %v698 = vpack.c.bf16 %v668, %v668
        %v699 = vpack.c.bf16 %v670, %v670
        %v700 = vpack.c.bf16 %v672, %v672
        %v701 = vpack.c.bf16 %v678, %v678
        %v702 = vpack.c.bf16 %v680, %v680
        %v703 = vpack.c.bf16 %v682, %v682
        %v704 = vpack.c.bf16 %v684, %v684
        %709 = vrot.lane.b32.xlu0 %v579, 96
        %v710 = vpop.permute.xlu0 %709
        %711 = vrot.lane.b32.xlu0 %v582, 96
        %v712 = vpop.permute.xlu0 %711
        %713 = vrot.lane.b32.xlu0 %v587, 96
        %v714 = vpop.permute.xlu0 %713
        %715 = vrot.lane.b32.xlu0 %v590, 96
        %v716 = vpop.permute.xlu0 %715
        %721 = vrot.lane.b32.xlu0 %v579, 64
        %v722 = vpop.permute.xlu0 %721
        %723 = vrot.lane.b32.xlu0 %v582, 64
        %v724 = vpop.permute.xlu0 %723
        %725 = vrot.lane.b32.xlu0 %v587, 64
        %v726 = vpop.permute.xlu0 %725
        %727 = vrot.lane.b32.xlu0 %v590, 64
        %v728 = vpop.permute.xlu0 %727
        %733 = vrot.lane.b32.xlu0 %v579, 32
        %v734 = vpop.permute.xlu0 %733
        %735 = vrot.lane.b32.xlu0 %v582, 32
        %v736 = vpop.permute.xlu0 %735
        %737 = vrot.lane.b32.xlu0 %v587, 32
        %v738 = vpop.permute.xlu0 %737
        %739 = vrot.lane.b32.xlu0 %v590, 32
        %v740 = vpop.permute.xlu0 %739
        %v745 = vpack.c.bf16 %v579, %v579
        %v746 = vpack.c.bf16 %v582, %v582
        %v747 = vpack.c.bf16 %v587, %v587
        %v748 = vpack.c.bf16 %v590, %v590
        %v749 = vpack.c.bf16 %v710, %v710
        %v750 = vpack.c.bf16 %v712, %v712
        %v751 = vpack.c.bf16 %v714, %v714
        %v752 = vpack.c.bf16 %v716, %v716
        %v753 = vpack.c.bf16 %v722, %v722
        %v754 = vpack.c.bf16 %v724, %v724
        %v755 = vpack.c.bf16 %v726, %v726
        %v756 = vpack.c.bf16 %v728, %v728
        %v757 = vpack.c.bf16 %v734, %v734
        %v758 = vpack.c.bf16 %v736, %v736
        %v759 = vpack.c.bf16 %v738, %v738
        %v760 = vpack.c.bf16 %v740, %v740
        %vm761 = vcmask 261120
        %v763 = vsel %vm761, %v633, 0
        %v766 = vsel %vm761, %v689, 0
        %768 = vmatprep.subr.bf16.mxu0 0
        %769 = vmatpush1.bf16.xpose.msra.mxu0 %v766
        %770 = vmatprep.subr.bf16.mxu0 0
        %771 = vmatpush1.bf16.xpose.msra.mxu0 0
        %772 = vmatprep.subr.bf16.mxu0 0
        %773 = vmatpush1.bf16.xpose.msra.mxu0 0
        %774 = vmatprep.subr.bf16.mxu0 0
        %775 = vmatpush1.bf16.xpose.msra.mxu0 0
        %776 = vmatprep.subr.bf16.mxu0 0
        %777 = vmatpush1.bf16.xpose.msra.mxu0 0
        %778 = vmatprep.subr.bf16.mxu0 0
        %779 = vmatpush1.bf16.xpose.msra.mxu0 0
        %780 = vmatprep.subr.bf16.mxu0 0
        %781 = vmatpush1.bf16.xpose.msra.mxu0 0
        %782 = vmatprep.subr.bf16.mxu0 0
        %783 = vmatpush1.bf16.xpose.msra.mxu0 0
        %784 = vmatprep.subr.bf16.mxu0 0
        %785 = vmatpush1.bf16.xpose.msra.mxu0 0
        %786 = vmatprep.subr.bf16.mxu0 0
        %787 = vmatpush1.bf16.xpose.msra.mxu0 0
        %788 = vmatprep.subr.bf16.mxu0 0
        %789 = vmatpush1.bf16.xpose.msra.mxu0 0
        %790 = vmatprep.subr.bf16.mxu0 0
        %791 = vmatpush1.bf16.xpose.msra.mxu0 0
        %792 = vmatprep.subr.bf16.mxu0 0
        %793 = vmatpush1.bf16.xpose.msra.mxu0 0
        %794 = vmatprep.subr.bf16.mxu0 0
        %795 = vmatpush1.bf16.xpose.msra.mxu0 0
        %796 = vmatprep.subr.bf16.mxu0 0
        %797 = vmatpush1.bf16.xpose.msra.mxu0 0
        %798 = vmatprep.subr.bf16.mxu0 0
        %799 = vmatpush1.bf16.xpose.msra.mxu0 0
        %800 = vmatprep.mubr.bf16.mxu0 0
        %801 = vmatmul.mubr.bf16.gmra.mrb[0].mxu0 %v763
        %v802 = vpop.f32.mrb[0].mxu0
        %v803 = vadd.f32 0.0, %v802
        %v804 = vpop.f32.mrb[0].mxu0
        %v805 = vpop.f32.mrb[0].mxu0
        %v806 = vpop.f32.mrb[0].mxu0
        %807 = vdwg.mxu0
        %v809 = vsel %vm761, %v634, 0
        %v812 = vsel %vm761, %v690, 0
        %814 = vmatprep.subr.bf16.mxu0 0
        %815 = vmatpush1.bf16.xpose.msra.mxu0 %v812
        %816 = vmatprep.subr.bf16.mxu0 0
        %817 = vmatpush1.bf16.xpose.msra.mxu0 0
        %818 = vmatprep.subr.bf16.mxu0 0
        %819 = vmatpush1.bf16.xpose.msra.mxu0 0
        %820 = vmatprep.subr.bf16.mxu0 0
        %821 = vmatpush1.bf16.xpose.msra.mxu0 0
        %822 = vmatprep.subr.bf16.mxu0 0
        %823 = vmatpush1.bf16.xpose.msra.mxu0 0
        %824 = vmatprep.subr.bf16.mxu0 0
        %825 = vmatpush1.bf16.xpose.msra.mxu0 0
        %826 = vmatprep.subr.bf16.mxu0 0
        %827 = vmatpush1.bf16.xpose.msra.mxu0 0
        %828 = vmatprep.subr.bf16.mxu0 0
        %829 = vmatpush1.bf16.xpose.msra.mxu0 0
        %830 = vmatprep.subr.bf16.mxu0 0
        %831 = vmatpush1.bf16.xpose.msra.mxu0 0
        %832 = vmatprep.subr.bf16.mxu0 0
        %833 = vmatpush1.bf16.xpose.msra.mxu0 0
        %834 = vmatprep.subr.bf16.mxu0 0
        %835 = vmatpush1.bf16.xpose.msra.mxu0 0
        %836 = vmatprep.subr.bf16.mxu0 0
        %837 = vmatpush1.bf16.xpose.msra.mxu0 0
        %838 = vmatprep.subr.bf16.mxu0 0
        %839 = vmatpush1.bf16.xpose.msra.mxu0 0
        %840 = vmatprep.subr.bf16.mxu0 0
        %841 = vmatpush1.bf16.xpose.msra.mxu0 0
        %842 = vmatprep.subr.bf16.mxu0 0
        %843 = vmatpush1.bf16.xpose.msra.mxu0 0
        %844 = vmatprep.subr.bf16.mxu0 0
        %845 = vmatpush1.bf16.xpose.msra.mxu0 0
        %846 = vmatprep.mubr.bf16.mxu0 0
        %847 = vmatmul.mubr.bf16.gmra.mrb[0].mxu0 %v809
        %v848 = vpop.f32.mrb[0].mxu0
        %v849 = vadd.f32 0.0, %v848
        %v850 = vpop.f32.mrb[0].mxu0
        %v851 = vpop.f32.mrb[0].mxu0
        %v852 = vpop.f32.mrb[0].mxu0
        %853 = vdwg.mxu0
        %v855 = vsel %vm761, %v635, 0
        %v858 = vsel %vm761, %v691, 0
        %860 = vmatprep.subr.bf16.mxu0 0
        %861 = vmatpush1.bf16.xpose.msra.mxu0 %v858
        %862 = vmatprep.subr.bf16.mxu0 0
        %863 = vmatpush1.bf16.xpose.msra.mxu0 0
        %864 = vmatprep.subr.bf16.mxu0 0
        %865 = vmatpush1.bf16.xpose.msra.mxu0 0
        %866 = vmatprep.subr.bf16.mxu0 0
        %867 = vmatpush1.bf16.xpose.msra.mxu0 0
        %868 = vmatprep.subr.bf16.mxu0 0
        %869 = vmatpush1.bf16.xpose.msra.mxu0 0
        %870 = vmatprep.subr.bf16.mxu0 0
        %871 = vmatpush1.bf16.xpose.msra.mxu0 0
        %872 = vmatprep.subr.bf16.mxu0 0
        %873 = vmatpush1.bf16.xpose.msra.mxu0 0
        %874 = vmatprep.subr.bf16.mxu0 0
        %875 = vmatpush1.bf16.xpose.msra.mxu0 0
        %876 = vmatprep.subr.bf16.mxu0 0
        %877 = vmatpush1.bf16.xpose.msra.mxu0 0
        %878 = vmatprep.subr.bf16.mxu0 0
        %879 = vmatpush1.bf16.xpose.msra.mxu0 0
        %880 = vmatprep.subr.bf16.mxu0 0
        %881 = vmatpush1.bf16.xpose.msra.mxu0 0
        %882 = vmatprep.subr.bf16.mxu0 0
        %883 = vmatpush1.bf16.xpose.msra.mxu0 0
        %884 = vmatprep.subr.bf16.mxu0 0
        %885 = vmatpush1.bf16.xpose.msra.mxu0 0
        %886 = vmatprep.subr.bf16.mxu0 0
        %887 = vmatpush1.bf16.xpose.msra.mxu0 0
        %888 = vmatprep.subr.bf16.mxu0 0
        %889 = vmatpush1.bf16.xpose.msra.mxu0 0
        %890 = vmatprep.subr.bf16.mxu0 0
        %891 = vmatpush1.bf16.xpose.msra.mxu0 0
        %892 = vmatprep.mubr.bf16.mxu0 0
        %893 = vmatmul.mubr.bf16.gmra.mrb[0].mxu0 %v855
        %v894 = vpop.f32.mrb[0].mxu0
        %v895 = vadd.f32 0.0, %v894
        %v896 = vpop.f32.mrb[0].mxu0
        %v897 = vpop.f32.mrb[0].mxu0
        %v898 = vpop.f32.mrb[0].mxu0
        %899 = vdwg.mxu0
        %v901 = vsel %vm761, %v636, 0
        %v904 = vsel %vm761, %v692, 0
        %906 = vmatprep.subr.bf16.mxu0 0
        %907 = vmatpush1.bf16.xpose.msra.mxu0 %v904
        %908 = vmatprep.subr.bf16.mxu0 0
        %909 = vmatpush1.bf16.xpose.msra.mxu0 0
        %910 = vmatprep.subr.bf16.mxu0 0
        %911 = vmatpush1.bf16.xpose.msra.mxu0 0
        %912 = vmatprep.subr.bf16.mxu0 0
        %913 = vmatpush1.bf16.xpose.msra.mxu0 0
        %914 = vmatprep.subr.bf16.mxu0 0
        %915 = vmatpush1.bf16.xpose.msra.mxu0 0
        %916 = vmatprep.subr.bf16.mxu0 0
        %917 = vmatpush1.bf16.xpose.msra.mxu0 0
        %918 = vmatprep.subr.bf16.mxu0 0
        %919 = vmatpush1.bf16.xpose.msra.mxu0 0
        %920 = vmatprep.subr.bf16.mxu0 0
        %921 = vmatpush1.bf16.xpose.msra.mxu0 0
        %922 = vmatprep.subr.bf16.mxu0 0
        %923 = vmatpush1.bf16.xpose.msra.mxu0 0
        %924 = vmatprep.subr.bf16.mxu0 0
        %925 = vmatpush1.bf16.xpose.msra.mxu0 0
        %926 = vmatprep.subr.bf16.mxu0 0
        %927 = vmatpush1.bf16.xpose.msra.mxu0 0
        %928 = vmatprep.subr.bf16.mxu0 0
        %929 = vmatpush1.bf16.xpose.msra.mxu0 0
        %930 = vmatprep.subr.bf16.mxu0 0
        %931 = vmatpush1.bf16.xpose.msra.mxu0 0
        %932 = vmatprep.subr.bf16.mxu0 0
        %933 = vmatpush1.bf16.xpose.msra.mxu0 0
        %934 = vmatprep.subr.bf16.mxu0 0
        %935 = vmatpush1.bf16.xpose.msra.mxu0 0
        %936 = vmatprep.subr.bf16.mxu0 0
        %937 = vmatpush1.bf16.xpose.msra.mxu0 0
        %938 = vmatprep.mubr.bf16.mxu0 0
        %939 = vmatmul.mubr.bf16.gmra.mrb[0].mxu0 %v901
        %v940 = vpop.f32.mrb[0].mxu0
        %v941 = vadd.f32 0.0, %v940
        %v942 = vpop.f32.mrb[0].mxu0
        %v943 = vpop.f32.mrb[0].mxu0
        %v944 = vpop.f32.mrb[0].mxu0
        %945 = vdwg.mxu0
        %v947 = vsel %vm761, %v637, 0
        %v950 = vsel %vm761, %v693, 0
        %952 = vmatprep.subr.bf16.mxu0 0
        %953 = vmatpush1.bf16.xpose.msra.mxu0 %v950
        %954 = vmatprep.subr.bf16.mxu0 0
        %955 = vmatpush1.bf16.xpose.msra.mxu0 0
        %956 = vmatprep.subr.bf16.mxu0 0
        %957 = vmatpush1.bf16.xpose.msra.mxu0 0
        %958 = vmatprep.subr.bf16.mxu0 0
        %959 = vmatpush1.bf16.xpose.msra.mxu0 0
        %960 = vmatprep.subr.bf16.mxu0 0
        %961 = vmatpush1.bf16.xpose.msra.mxu0 0
        %962 = vmatprep.subr.bf16.mxu0 0
        %963 = vmatpush1.bf16.xpose.msra.mxu0 0
        %964 = vmatprep.subr.bf16.mxu0 0
        %965 = vmatpush1.bf16.xpose.msra.mxu0 0
        %966 = vmatprep.subr.bf16.mxu0 0
        %967 = vmatpush1.bf16.xpose.msra.mxu0 0
        %968 = vmatprep.subr.bf16.mxu0 0
        %969 = vmatpush1.bf16.xpose.msra.mxu0 0
        %970 = vmatprep.subr.bf16.mxu0 0
        %971 = vmatpush1.bf16.xpose.msra.mxu0 0
        %972 = vmatprep.subr.bf16.mxu0 0
        %973 = vmatpush1.bf16.xpose.msra.mxu0 0
        %974 = vmatprep.subr.bf16.mxu0 0
        %975 = vmatpush1.bf16.xpose.msra.mxu0 0
        %976 = vmatprep.subr.bf16.mxu0 0
        %977 = vmatpush1.bf16.xpose.msra.mxu0 0
        %978 = vmatprep.subr.bf16.mxu0 0
        %979 = vmatpush1.bf16.xpose.msra.mxu0 0
        %980 = vmatprep.subr.bf16.mxu0 0
        %981 = vmatpush1.bf16.xpose.msra.mxu0 0
        %982 = vmatprep.subr.bf16.mxu0 0
        %983 = vmatpush1.bf16.xpose.msra.mxu0 0
        %984 = vmatprep.mubr.bf16.mxu0 0
        %985 = vmatmul.mubr.bf16.gmra.mrb[0].mxu0 %v947
        %v986 = vpop.f32.mrb[0].mxu0
        %v987 = vadd.f32 0.0, %v986
        %v988 = vpop.f32.mrb[0].mxu0
        %v989 = vpop.f32.mrb[0].mxu0
        %v990 = vpop.f32.mrb[0].mxu0
        %991 = vdwg.mxu0
        %v993 = vsel %vm761, %v638, 0
        %v996 = vsel %vm761, %v694, 0
        %998 = vmatprep.subr.bf16.mxu0 0
        %999 = vmatpush1.bf16.xpose.msra.mxu0 %v996
        %1000 = vmatprep.subr.bf16.mxu0 0
        %1001 = vmatpush1.bf16.xpose.msra.mxu0 0
        %1002 = vmatprep.subr.bf16.mxu0 0
        %1003 = vmatpush1.bf16.xpose.msra.mxu0 0
        %1004 = vmatprep.subr.bf16.mxu0 0
        %1005 = vmatpush1.bf16.xpose.msra.mxu0 0
        %1006 = vmatprep.subr.bf16.mxu0 0
        %1007 = vmatpush1.bf16.xpose.msra.mxu0 0
        %1008 = vmatprep.subr.bf16.mxu0 0
        %1009 = vmatpush1.bf16.xpose.msra.mxu0 0
        %1010 = vmatprep.subr.bf16.mxu0 0
        %1011 = vmatpush1.bf16.xpose.msra.mxu0 0
        %1012 = vmatprep.subr.bf16.mxu0 0
        %1013 = vmatpush1.bf16.xpose.msra.mxu0 0
        %1014 = vmatprep.subr.bf16.mxu0 0
        %1015 = vmatpush1.bf16.xpose.msra.mxu0 0
        %1016 = vmatprep.subr.bf16.mxu0 0
        %1017 = vmatpush1.bf16.xpose.msra.mxu0 0
        %1018 = vmatprep.subr.bf16.mxu0 0
        %1019 = vmatpush1.bf16.xpose.msra.mxu0 0
        %1020 = vmatprep.subr.bf16.mxu0 0
        %1021 = vmatpush1.bf16.xpose.msra.mxu0 0
        %1022 = vmatprep.subr.bf16.mxu0 0
        %1023 = vmatpush1.bf16.xpose.msra.mxu0 0
        %1024 = vmatprep.subr.bf16.mxu0 0
        %1025 = vmatpush1.bf16.xpose.msra.mxu0 0
        %1026 = vmatprep.subr.bf16.mxu0 0
        %1027 = vmatpush1.bf16.xpose.msra.mxu0 0
        %1028 = vmatprep.subr.bf16.mxu0 0
        %1029 = vmatpush1.bf16.xpose.msra.mxu0 0
        %1030 = vmatprep.mubr.bf16.mxu0 0
        %1031 = vmatmul.mubr.bf16.gmra.mrb[0].mxu0 %v993
        %v1032 = vpop.f32.mrb[0].mxu0
        %v1033 = vadd.f32 0.0, %v1032
        %v1034 = vpop.f32.mrb[0].mxu0
        %v1035 = vpop.f32.mrb[0].mxu0
        %v1036 = vpop.f32.mrb[0].mxu0
        %1037 = vdwg.mxu0
        %v1039 = vsel %vm761, %v639, 0
        %v1042 = vsel %vm761, %v695, 0
        %1044 = vmatprep.subr.bf16.mxu0 0
        %1045 = vmatpush1.bf16.xpose.msra.mxu0 %v1042
        %1046 = vmatprep.subr.bf16.mxu0 0
        %1047 = vmatpush1.bf16.xpose.msra.mxu0 0
        %1048 = vmatprep.subr.bf16.mxu0 0
        %1049 = vmatpush1.bf16.xpose.msra.mxu0 0
        %1050 = vmatprep.subr.bf16.mxu0 0
        %1051 = vmatpush1.bf16.xpose.msra.mxu0 0
        %1052 = vmatprep.subr.bf16.mxu0 0
        %1053 = vmatpush1.bf16.xpose.msra.mxu0 0
        %1054 = vmatprep.subr.bf16.mxu0 0
        %1055 = vmatpush1.bf16.xpose.msra.mxu0 0
        %1056 = vmatprep.subr.bf16.mxu0 0
        %1057 = vmatpush1.bf16.xpose.msra.mxu0 0
        %1058 = vmatprep.subr.bf16.mxu0 0
        %1059 = vmatpush1.bf16.xpose.msra.mxu0 0
        %1060 = vmatprep.subr.bf16.mxu0 0
        %1061 = vmatpush1.bf16.xpose.msra.mxu0 0
        %1062 = vmatprep.subr.bf16.mxu0 0
        %1063 = vmatpush1.bf16.xpose.msra.mxu0 0
        %1064 = vmatprep.subr.bf16.mxu0 0
        %1065 = vmatpush1.bf16.xpose.msra.mxu0 0
        %1066 = vmatprep.subr.bf16.mxu0 0
        %1067 = vmatpush1.bf16.xpose.msra.mxu0 0
        %1068 = vmatprep.subr.bf16.mxu0 0
        %1069 = vmatpush1.bf16.xpose.msra.mxu0 0
        %1070 = vmatprep.subr.bf16.mxu0 0
        %1071 = vmatpush1.bf16.xpose.msra.mxu0 0
        %1072 = vmatprep.subr.bf16.mxu0 0
        %1073 = vmatpush1.bf16.xpose.msra.mxu0 0
        %1074 = vmatprep.subr.bf16.mxu0 0
        %1075 = vmatpush1.bf16.xpose.msra.mxu0 0
        %1076 = vmatprep.mubr.bf16.mxu0 0
        %1077 = vmatmul.mubr.bf16.gmra.mrb[0].mxu0 %v1039
        %v1078 = vpop.f32.mrb[0].mxu0
        %v1079 = vadd.f32 0.0, %v1078
        %v1080 = vpop.f32.mrb[0].mxu0
        %v1081 = vpop.f32.mrb[0].mxu0
        %v1082 = vpop.f32.mrb[0].mxu0
        %1083 = vdwg.mxu0
        %v1085 = vsel %vm761, %v640, 0
        %v1088 = vsel %vm761, %v696, 0
        %1090 = vmatprep.subr.bf16.mxu0 0
        %1091 = vmatpush1.bf16.xpose.msra.mxu0 %v1088
        %1092 = vmatprep.subr.bf16.mxu0 0
        %1093 = vmatpush1.bf16.xpose.msra.mxu0 0
        %1094 = vmatprep.subr.bf16.mxu0 0
        %1095 = vmatpush1.bf16.xpose.msra.mxu0 0
        %1096 = vmatprep.subr.bf16.mxu0 0
        %1097 = vmatpush1.bf16.xpose.msra.mxu0 0
        %1098 = vmatprep.subr.bf16.mxu0 0
        %1099 = vmatpush1.bf16.xpose.msra.mxu0 0
        %1100 = vmatprep.subr.bf16.mxu0 0
        %1101 = vmatpush1.bf16.xpose.msra.mxu0 0
        %1102 = vmatprep.subr.bf16.mxu0 0
        %1103 = vmatpush1.bf16.xpose.msra.mxu0 0
        %1104 = vmatprep.subr.bf16.mxu0 0
        %1105 = vmatpush1.bf16.xpose.msra.mxu0 0
        %1106 = vmatprep.subr.bf16.mxu0 0
        %1107 = vmatpush1.bf16.xpose.msra.mxu0 0
        %1108 = vmatprep.subr.bf16.mxu0 0
        %1109 = vmatpush1.bf16.xpose.msra.mxu0 0
        %1110 = vmatprep.subr.bf16.mxu0 0
        %1111 = vmatpush1.bf16.xpose.msra.mxu0 0
        %1112 = vmatprep.subr.bf16.mxu0 0
        %1113 = vmatpush1.bf16.xpose.msra.mxu0 0
        %1114 = vmatprep.subr.bf16.mxu0 0
        %1115 = vmatpush1.bf16.xpose.msra.mxu0 0
        %1116 = vmatprep.subr.bf16.mxu0 0
        %1117 = vmatpush1.bf16.xpose.msra.mxu0 0
        %1118 = vmatprep.subr.bf16.mxu0 0
        %1119 = vmatpush1.bf16.xpose.msra.mxu0 0
        %1120 = vmatprep.subr.bf16.mxu0 0
        %1121 = vmatpush1.bf16.xpose.msra.mxu0 0
        %1122 = vmatprep.mubr.bf16.mxu0 0
        %1123 = vmatmul.mubr.bf16.gmra.mrb[0].mxu0 %v1085
        %v1124 = vpop.f32.mrb[0].mxu0
        %v1125 = vadd.f32 0.0, %v1124
        %v1126 = vpop.f32.mrb[0].mxu0
        %v1127 = vpop.f32.mrb[0].mxu0
        %v1128 = vpop.f32.mrb[0].mxu0
        %1129 = vdwg.mxu0
        %v1131 = vsel %vm761, %v641, 0
        %v1134 = vsel %vm761, %v697, 0
        %1136 = vmatprep.subr.bf16.mxu0 0
        %1137 = vmatpush1.bf16.xpose.msra.mxu0 %v1134
        %1138 = vmatprep.subr.bf16.mxu0 0
        %1139 = vmatpush1.bf16.xpose.msra.mxu0 0
        %1140 = vmatprep.subr.bf16.mxu0 0
        %1141 = vmatpush1.bf16.xpose.msra.mxu0 0
        %1142 = vmatprep.subr.bf16.mxu0 0
        %1143 = vmatpush1.bf16.xpose.msra.mxu0 0
        %1144 = vmatprep.subr.bf16.mxu0 0
        %1145 = vmatpush1.bf16.xpose.msra.mxu0 0
        %1146 = vmatprep.subr.bf16.mxu0 0
        %1147 = vmatpush1.bf16.xpose.msra.mxu0 0
        %1148 = vmatprep.subr.bf16.mxu0 0
        %1149 = vmatpush1.bf16.xpose.msra.mxu0 0
        %1150 = vmatprep.subr.bf16.mxu0 0
        %1151 = vmatpush1.bf16.xpose.msra.mxu0 0
        %1152 = vmatprep.subr.bf16.mxu0 0
        %1153 = vmatpush1.bf16.xpose.msra.mxu0 0
        %1154 = vmatprep.subr.bf16.mxu0 0
        %1155 = vmatpush1.bf16.xpose.msra.mxu0 0
        %1156 = vmatprep.subr.bf16.mxu0 0
        %1157 = vmatpush1.bf16.xpose.msra.mxu0 0
        %1158 = vmatprep.subr.bf16.mxu0 0
        %1159 = vmatpush1.bf16.xpose.msra.mxu0 0
        %1160 = vmatprep.subr.bf16.mxu0 0
        %1161 = vmatpush1.bf16.xpose.msra.mxu0 0
        %1162 = vmatprep.subr.bf16.mxu0 0
        %1163 = vmatpush1.bf16.xpose.msra.mxu0 0
        %1164 = vmatprep.subr.bf16.mxu0 0
        %1165 = vmatpush1.bf16.xpose.msra.mxu0 0
        %1166 = vmatprep.subr.bf16.mxu0 0
        %1167 = vmatpush1.bf16.xpose.msra.mxu0 0
        %1168 = vmatprep.mubr.bf16.mxu0 0
        %1169 = vmatmul.mubr.bf16.gmra.mrb[0].mxu0 %v1131
        %v1170 = vpop.f32.mrb[0].mxu0
        %v1171 = vadd.f32 0.0, %v1170
        %v1172 = vpop.f32.mrb[0].mxu0
        %v1173 = vpop.f32.mrb[0].mxu0
        %v1174 = vpop.f32.mrb[0].mxu0
        %1175 = vdwg.mxu0
        %v1177 = vsel %vm761, %v642, 0
        %v1180 = vsel %vm761, %v698, 0
        %1182 = vmatprep.subr.bf16.mxu0 0
        %1183 = vmatpush1.bf16.xpose.msra.mxu0 %v1180
        %1184 = vmatprep.subr.bf16.mxu0 0
        %1185 = vmatpush1.bf16.xpose.msra.mxu0 0
        %1186 = vmatprep.subr.bf16.mxu0 0
        %1187 = vmatpush1.bf16.xpose.msra.mxu0 0
        %1188 = vmatprep.subr.bf16.mxu0 0
        %1189 = vmatpush1.bf16.xpose.msra.mxu0 0
        %1190 = vmatprep.subr.bf16.mxu0 0
        %1191 = vmatpush1.bf16.xpose.msra.mxu0 0
        %1192 = vmatprep.subr.bf16.mxu0 0
        %1193 = vmatpush1.bf16.xpose.msra.mxu0 0
        %1194 = vmatprep.subr.bf16.mxu0 0
        %1195 = vmatpush1.bf16.xpose.msra.mxu0 0
        %1196 = vmatprep.subr.bf16.mxu0 0
        %1197 = vmatpush1.bf16.xpose.msra.mxu0 0
        %1198 = vmatprep.subr.bf16.mxu0 0
        %1199 = vmatpush1.bf16.xpose.msra.mxu0 0
        %1200 = vmatprep.subr.bf16.mxu0 0
        %1201 = vmatpush1.bf16.xpose.msra.mxu0 0
        %1202 = vmatprep.subr.bf16.mxu0 0
        %1203 = vmatpush1.bf16.xpose.msra.mxu0 0
        %1204 = vmatprep.subr.bf16.mxu0 0
        %1205 = vmatpush1.bf16.xpose.msra.mxu0 0
        %1206 = vmatprep.subr.bf16.mxu0 0
        %1207 = vmatpush1.bf16.xpose.msra.mxu0 0
        %1208 = vmatprep.subr.bf16.mxu0 0
        %1209 = vmatpush1.bf16.xpose.msra.mxu0 0
        %1210 = vmatprep.subr.bf16.mxu0 0
        %1211 = vmatpush1.bf16.xpose.msra.mxu0 0
        %1212 = vmatprep.subr.bf16.mxu0 0
        %1213 = vmatpush1.bf16.xpose.msra.mxu0 0
        %1214 = vmatprep.mubr.bf16.mxu0 0
        %1215 = vmatmul.mubr.bf16.gmra.mrb[0].mxu0 %v1177
        %v1216 = vpop.f32.mrb[0].mxu0
        %v1217 = vadd.f32 0.0, %v1216
        %v1218 = vpop.f32.mrb[0].mxu0
        %v1219 = vpop.f32.mrb[0].mxu0
        %v1220 = vpop.f32.mrb[0].mxu0
        %1221 = vdwg.mxu0
        %v1223 = vsel %vm761, %v643, 0
        %v1226 = vsel %vm761, %v699, 0
        %1228 = vmatprep.subr.bf16.mxu0 0
        %1229 = vmatpush1.bf16.xpose.msra.mxu0 %v1226
        %1230 = vmatprep.subr.bf16.mxu0 0
        %1231 = vmatpush1.bf16.xpose.msra.mxu0 0
        %1232 = vmatprep.subr.bf16.mxu0 0
        %1233 = vmatpush1.bf16.xpose.msra.mxu0 0
        %1234 = vmatprep.subr.bf16.mxu0 0
        %1235 = vmatpush1.bf16.xpose.msra.mxu0 0
        %1236 = vmatprep.subr.bf16.mxu0 0
        %1237 = vmatpush1.bf16.xpose.msra.mxu0 0
        %1238 = vmatprep.subr.bf16.mxu0 0
        %1239 = vmatpush1.bf16.xpose.msra.mxu0 0
        %1240 = vmatprep.subr.bf16.mxu0 0
        %1241 = vmatpush1.bf16.xpose.msra.mxu0 0
        %1242 = vmatprep.subr.bf16.mxu0 0
        %1243 = vmatpush1.bf16.xpose.msra.mxu0 0
        %1244 = vmatprep.subr.bf16.mxu0 0
        %1245 = vmatpush1.bf16.xpose.msra.mxu0 0
        %1246 = vmatprep.subr.bf16.mxu0 0
        %1247 = vmatpush1.bf16.xpose.msra.mxu0 0
        %1248 = vmatprep.subr.bf16.mxu0 0
        %1249 = vmatpush1.bf16.xpose.msra.mxu0 0
        %1250 = vmatprep.subr.bf16.mxu0 0
        %1251 = vmatpush1.bf16.xpose.msra.mxu0 0
        %1252 = vmatprep.subr.bf16.mxu0 0
        %1253 = vmatpush1.bf16.xpose.msra.mxu0 0
        %1254 = vmatprep.subr.bf16.mxu0 0
        %1255 = vmatpush1.bf16.xpose.msra.mxu0 0
        %1256 = vmatprep.subr.bf16.mxu0 0
        %1257 = vmatpush1.bf16.xpose.msra.mxu0 0
        %1258 = vmatprep.subr.bf16.mxu0 0
        %1259 = vmatpush1.bf16.xpose.msra.mxu0 0
        %1260 = vmatprep.mubr.bf16.mxu0 0
        %1261 = vmatmul.mubr.bf16.gmra.mrb[0].mxu0 %v1223
        %v1262 = vpop.f32.mrb[0].mxu0
        %v1263 = vadd.f32 0.0, %v1262
        %v1264 = vpop.f32.mrb[0].mxu0
        %v1265 = vpop.f32.mrb[0].mxu0
        %v1266 = vpop.f32.mrb[0].mxu0
        %1267 = vdwg.mxu0
        %v1269 = vsel %vm761, %v644, 0
        %v1272 = vsel %vm761, %v700, 0
        %1274 = vmatprep.subr.bf16.mxu0 0
        %1275 = vmatpush1.bf16.xpose.msra.mxu0 %v1272
        %1276 = vmatprep.subr.bf16.mxu0 0
        %1277 = vmatpush1.bf16.xpose.msra.mxu0 0
        %1278 = vmatprep.subr.bf16.mxu0 0
        %1279 = vmatpush1.bf16.xpose.msra.mxu0 0
        %1280 = vmatprep.subr.bf16.mxu0 0
        %1281 = vmatpush1.bf16.xpose.msra.mxu0 0
        %1282 = vmatprep.subr.bf16.mxu0 0
        %1283 = vmatpush1.bf16.xpose.msra.mxu0 0
        %1284 = vmatprep.subr.bf16.mxu0 0
        %1285 = vmatpush1.bf16.xpose.msra.mxu0 0
        %1286 = vmatprep.subr.bf16.mxu0 0
        %1287 = vmatpush1.bf16.xpose.msra.mxu0 0
        %1288 = vmatprep.subr.bf16.mxu0 0
        %1289 = vmatpush1.bf16.xpose.msra.mxu0 0
        %1290 = vmatprep.subr.bf16.mxu0 0
        %1291 = vmatpush1.bf16.xpose.msra.mxu0 0
        %1292 = vmatprep.subr.bf16.mxu0 0
        %1293 = vmatpush1.bf16.xpose.msra.mxu0 0
        %1294 = vmatprep.subr.bf16.mxu0 0
        %1295 = vmatpush1.bf16.xpose.msra.mxu0 0
        %1296 = vmatprep.subr.bf16.mxu0 0
        %1297 = vmatpush1.bf16.xpose.msra.mxu0 0
        %1298 = vmatprep.subr.bf16.mxu0 0
        %1299 = vmatpush1.bf16.xpose.msra.mxu0 0
        %1300 = vmatprep.subr.bf16.mxu0 0
        %1301 = vmatpush1.bf16.xpose.msra.mxu0 0
        %1302 = vmatprep.subr.bf16.mxu0 0
        %1303 = vmatpush1.bf16.xpose.msra.mxu0 0
        %1304 = vmatprep.subr.bf16.mxu0 0
        %1305 = vmatpush1.bf16.xpose.msra.mxu0 0
        %1306 = vmatprep.mubr.bf16.mxu0 0
        %1307 = vmatmul.mubr.bf16.gmra.mrb[0].mxu0 %v1269
        %v1308 = vpop.f32.mrb[0].mxu0
        %v1309 = vadd.f32 0.0, %v1308
        %v1310 = vpop.f32.mrb[0].mxu0
        %v1311 = vpop.f32.mrb[0].mxu0
        %v1312 = vpop.f32.mrb[0].mxu0
        %1313 = vdwg.mxu0
        %v1315 = vsel %vm761, %v645, 0
        %v1318 = vsel %vm761, %v701, 0
        %1320 = vmatprep.subr.bf16.mxu0 0
        %1321 = vmatpush1.bf16.xpose.msra.mxu0 %v1318
        %1322 = vmatprep.subr.bf16.mxu0 0
        %1323 = vmatpush1.bf16.xpose.msra.mxu0 0
        %1324 = vmatprep.subr.bf16.mxu0 0
        %1325 = vmatpush1.bf16.xpose.msra.mxu0 0
        %1326 = vmatprep.subr.bf16.mxu0 0
        %1327 = vmatpush1.bf16.xpose.msra.mxu0 0
        %1328 = vmatprep.subr.bf16.mxu0 0
        %1329 = vmatpush1.bf16.xpose.msra.mxu0 0
        %1330 = vmatprep.subr.bf16.mxu0 0
        %1331 = vmatpush1.bf16.xpose.msra.mxu0 0
        %1332 = vmatprep.subr.bf16.mxu0 0
        %1333 = vmatpush1.bf16.xpose.msra.mxu0 0
        %1334 = vmatprep.subr.bf16.mxu0 0
        %1335 = vmatpush1.bf16.xpose.msra.mxu0 0
        %1336 = vmatprep.subr.bf16.mxu0 0
        %1337 = vmatpush1.bf16.xpose.msra.mxu0 0
        %1338 = vmatprep.subr.bf16.mxu0 0
        %1339 = vmatpush1.bf16.xpose.msra.mxu0 0
        %1340 = vmatprep.subr.bf16.mxu0 0
        %1341 = vmatpush1.bf16.xpose.msra.mxu0 0
        %1342 = vmatprep.subr.bf16.mxu0 0
        %1343 = vmatpush1.bf16.xpose.msra.mxu0 0
        %1344 = vmatprep.subr.bf16.mxu0 0
        %1345 = vmatpush1.bf16.xpose.msra.mxu0 0
        %1346 = vmatprep.subr.bf16.mxu0 0
        %1347 = vmatpush1.bf16.xpose.msra.mxu0 0
        %1348 = vmatprep.subr.bf16.mxu0 0
        %1349 = vmatpush1.bf16.xpose.msra.mxu0 0
        %1350 = vmatprep.subr.bf16.mxu0 0
        %1351 = vmatpush1.bf16.xpose.msra.mxu0 0
        %1352 = vmatprep.mubr.bf16.mxu0 0
        %1353 = vmatmul.mubr.bf16.gmra.mrb[0].mxu0 %v1315
        %v1354 = vpop.f32.mrb[0].mxu0
        %v1355 = vadd.f32 0.0, %v1354
        %v1356 = vpop.f32.mrb[0].mxu0
        %v1357 = vpop.f32.mrb[0].mxu0
        %v1358 = vpop.f32.mrb[0].mxu0
        %1359 = vdwg.mxu0
        %v1361 = vsel %vm761, %v646, 0
        %v1364 = vsel %vm761, %v702, 0
        %1366 = vmatprep.subr.bf16.mxu0 0
        %1367 = vmatpush1.bf16.xpose.msra.mxu0 %v1364
        %1368 = vmatprep.subr.bf16.mxu0 0
        %1369 = vmatpush1.bf16.xpose.msra.mxu0 0
        %1370 = vmatprep.subr.bf16.mxu0 0
        %1371 = vmatpush1.bf16.xpose.msra.mxu0 0
        %1372 = vmatprep.subr.bf16.mxu0 0
        %1373 = vmatpush1.bf16.xpose.msra.mxu0 0
        %1374 = vmatprep.subr.bf16.mxu0 0
        %1375 = vmatpush1.bf16.xpose.msra.mxu0 0
        %1376 = vmatprep.subr.bf16.mxu0 0
        %1377 = vmatpush1.bf16.xpose.msra.mxu0 0
        %1378 = vmatprep.subr.bf16.mxu0 0
        %1379 = vmatpush1.bf16.xpose.msra.mxu0 0
        %1380 = vmatprep.subr.bf16.mxu0 0
        %1381 = vmatpush1.bf16.xpose.msra.mxu0 0
        %1382 = vmatprep.subr.bf16.mxu0 0
        %1383 = vmatpush1.bf16.xpose.msra.mxu0 0
        %1384 = vmatprep.subr.bf16.mxu0 0
        %1385 = vmatpush1.bf16.xpose.msra.mxu0 0
        %1386 = vmatprep.subr.bf16.mxu0 0
        %1387 = vmatpush1.bf16.xpose.msra.mxu0 0
        %1388 = vmatprep.subr.bf16.mxu0 0
        %1389 = vmatpush1.bf16.xpose.msra.mxu0 0
        %1390 = vmatprep.subr.bf16.mxu0 0
        %1391 = vmatpush1.bf16.xpose.msra.mxu0 0
        %1392 = vmatprep.subr.bf16.mxu0 0
        %1393 = vmatpush1.bf16.xpose.msra.mxu0 0
        %1394 = vmatprep.subr.bf16.mxu0 0
        %1395 = vmatpush1.bf16.xpose.msra.mxu0 0
        %1396 = vmatprep.subr.bf16.mxu0 0
        %1397 = vmatpush1.bf16.xpose.msra.mxu0 0
        %1398 = vmatprep.mubr.bf16.mxu0 0
        %1399 = vmatmul.mubr.bf16.gmra.mrb[0].mxu0 %v1361
        %v1400 = vpop.f32.mrb[0].mxu0
        %v1401 = vadd.f32 0.0, %v1400
        %v1402 = vpop.f32.mrb[0].mxu0
        %v1403 = vpop.f32.mrb[0].mxu0
        %v1404 = vpop.f32.mrb[0].mxu0
        %1405 = vdwg.mxu0
        %v1407 = vsel %vm761, %v647, 0
        %v1410 = vsel %vm761, %v703, 0
        %1412 = vmatprep.subr.bf16.mxu0 0
        %1413 = vmatpush1.bf16.xpose.msra.mxu0 %v1410
        %1414 = vmatprep.subr.bf16.mxu0 0
        %1415 = vmatpush1.bf16.xpose.msra.mxu0 0
        %1416 = vmatprep.subr.bf16.mxu0 0
        %1417 = vmatpush1.bf16.xpose.msra.mxu0 0
        %1418 = vmatprep.subr.bf16.mxu0 0
        %1419 = vmatpush1.bf16.xpose.msra.mxu0 0
        %1420 = vmatprep.subr.bf16.mxu0 0
        %1421 = vmatpush1.bf16.xpose.msra.mxu0 0
        %1422 = vmatprep.subr.bf16.mxu0 0
        %1423 = vmatpush1.bf16.xpose.msra.mxu0 0
        %1424 = vmatprep.subr.bf16.mxu0 0
        %1425 = vmatpush1.bf16.xpose.msra.mxu0 0
        %1426 = vmatprep.subr.bf16.mxu0 0
        %1427 = vmatpush1.bf16.xpose.msra.mxu0 0
        %1428 = vmatprep.subr.bf16.mxu0 0
        %1429 = vmatpush1.bf16.xpose.msra.mxu0 0
        %1430 = vmatprep.subr.bf16.mxu0 0
        %1431 = vmatpush1.bf16.xpose.msra.mxu0 0
        %1432 = vmatprep.subr.bf16.mxu0 0
        %1433 = vmatpush1.bf16.xpose.msra.mxu0 0
        %1434 = vmatprep.subr.bf16.mxu0 0
        %1435 = vmatpush1.bf16.xpose.msra.mxu0 0
        %1436 = vmatprep.subr.bf16.mxu0 0
        %1437 = vmatpush1.bf16.xpose.msra.mxu0 0
        %1438 = vmatprep.subr.bf16.mxu0 0
        %1439 = vmatpush1.bf16.xpose.msra.mxu0 0
        %1440 = vmatprep.subr.bf16.mxu0 0
        %1441 = vmatpush1.bf16.xpose.msra.mxu0 0
        %1442 = vmatprep.subr.bf16.mxu0 0
        %1443 = vmatpush1.bf16.xpose.msra.mxu0 0
        %1444 = vmatprep.mubr.bf16.mxu0 0
        %1445 = vmatmul.mubr.bf16.gmra.mrb[0].mxu0 %v1407
        %v1446 = vpop.f32.mrb[0].mxu0
        %v1447 = vadd.f32 0.0, %v1446
        %v1448 = vpop.f32.mrb[0].mxu0
        %v1449 = vpop.f32.mrb[0].mxu0
        %v1450 = vpop.f32.mrb[0].mxu0
        %1451 = vdwg.mxu0
        %v1453 = vsel %vm761, %v648, 0
        %v1456 = vsel %vm761, %v704, 0
        %1458 = vmatprep.subr.bf16.mxu0 0
        %1459 = vmatpush1.bf16.xpose.msra.mxu0 %v1456
        %1460 = vmatprep.subr.bf16.mxu0 0
        %1461 = vmatpush1.bf16.xpose.msra.mxu0 0
        %1462 = vmatprep.subr.bf16.mxu0 0
        %1463 = vmatpush1.bf16.xpose.msra.mxu0 0
        %1464 = vmatprep.subr.bf16.mxu0 0
        %1465 = vmatpush1.bf16.xpose.msra.mxu0 0
        %1466 = vmatprep.subr.bf16.mxu0 0
        %1467 = vmatpush1.bf16.xpose.msra.mxu0 0
        %1468 = vmatprep.subr.bf16.mxu0 0
        %1469 = vmatpush1.bf16.xpose.msra.mxu0 0
        %1470 = vmatprep.subr.bf16.mxu0 0
        %1471 = vmatpush1.bf16.xpose.msra.mxu0 0
        %1472 = vmatprep.subr.bf16.mxu0 0
        %1473 = vmatpush1.bf16.xpose.msra.mxu0 0
        %1474 = vmatprep.subr.bf16.mxu0 0
        %1475 = vmatpush1.bf16.xpose.msra.mxu0 0
        %1476 = vmatprep.subr.bf16.mxu0 0
        %1477 = vmatpush1.bf16.xpose.msra.mxu0 0
        %1478 = vmatprep.subr.bf16.mxu0 0
        %1479 = vmatpush1.bf16.xpose.msra.mxu0 0
        %1480 = vmatprep.subr.bf16.mxu0 0
        %1481 = vmatpush1.bf16.xpose.msra.mxu0 0
        %1482 = vmatprep.subr.bf16.mxu0 0
        %1483 = vmatpush1.bf16.xpose.msra.mxu0 0
        %1484 = vmatprep.subr.bf16.mxu0 0
        %1485 = vmatpush1.bf16.xpose.msra.mxu0 0
        %1486 = vmatprep.subr.bf16.mxu0 0
        %1487 = vmatpush1.bf16.xpose.msra.mxu0 0
        %1488 = vmatprep.subr.bf16.mxu0 0
        %1489 = vmatpush1.bf16.xpose.msra.mxu0 0
        %1490 = vmatprep.mubr.bf16.mxu0 0
        %1491 = vmatmul.mubr.bf16.gmra.mrb[0].mxu0 %v1453
        %v1492 = vpop.f32.mrb[0].mxu0
        %v1493 = vadd.f32 0.0, %v1492
        %v1494 = vpop.f32.mrb[0].mxu0
        %v1495 = vpop.f32.mrb[0].mxu0
        %v1496 = vpop.f32.mrb[0].mxu0
        %1497 = vdwg.mxu0
        %vm1498 = vcmask 64512
        %v1499 = vsel %vm1498, %v803, -inf
        %1500 = vmax.xlane.f32.xlu0 %v1499
        %v1501 = vpop.xlane.xlu0 %1500
        %v1502 = vsel %vm1498, %v849, -inf
        %1503 = vmax.xlane.f32.xlu0 %v1502
        %v1504 = vpop.xlane.xlu0 %1503
        %v1505 = vsel %vm1498, %v895, -inf
        %1506 = vmax.xlane.f32.xlu0 %v1505
        %v1507 = vpop.xlane.xlu0 %1506
        %v1508 = vsel %vm1498, %v941, -inf
        %1509 = vmax.xlane.f32.xlu0 %v1508
        %v1510 = vpop.xlane.xlu0 %1509
        %v1511 = vsel %vm1498, %v987, -inf
        %1512 = vmax.xlane.f32.xlu0 %v1511
        %v1513 = vpop.xlane.xlu0 %1512
        %v1514 = vsel %vm1498, %v1033, -inf
        %1515 = vmax.xlane.f32.xlu0 %v1514
        %v1516 = vpop.xlane.xlu0 %1515
        %v1517 = vsel %vm1498, %v1079, -inf
        %1518 = vmax.xlane.f32.xlu0 %v1517
        %v1519 = vpop.xlane.xlu0 %1518
        %v1520 = vsel %vm1498, %v1125, -inf
        %1521 = vmax.xlane.f32.xlu0 %v1520
        %v1522 = vpop.xlane.xlu0 %1521
        %v1523 = vsel %vm1498, %v1171, -inf
        %1524 = vmax.xlane.f32.xlu0 %v1523
        %v1525 = vpop.xlane.xlu0 %1524
        %v1526 = vsel %vm1498, %v1217, -inf
        %1527 = vmax.xlane.f32.xlu0 %v1526
        %v1528 = vpop.xlane.xlu0 %1527
        %v1529 = vsel %vm1498, %v1263, -inf
        %1530 = vmax.xlane.f32.xlu0 %v1529
        %v1531 = vpop.xlane.xlu0 %1530
        %v1532 = vsel %vm1498, %v1309, -inf
        %1533 = vmax.xlane.f32.xlu0 %v1532
        %v1534 = vpop.xlane.xlu0 %1533
        %v1535 = vsel %vm1498, %v1355, -inf
        %1536 = vmax.xlane.f32.xlu0 %v1535
        %v1537 = vpop.xlane.xlu0 %1536
        %v1538 = vsel %vm1498, %v1401, -inf
        %1539 = vmax.xlane.f32.xlu0 %v1538
        %v1540 = vpop.xlane.xlu0 %1539
        %v1541 = vsel %vm1498, %v1447, -inf
        %1542 = vmax.xlane.f32.xlu0 %v1541
        %v1543 = vpop.xlane.xlu0 %1542
        %v1544 = vsel %vm1498, %v1493, -inf
        %1545 = vmax.xlane.f32.xlu0 %v1544
        %v1546 = vpop.xlane.xlu0 %1545
        %v1547 = vsub.f32 %v803, %v1501
        %v1548 = vsub.f32 %v849, %v1504
        %v1549 = vsub.f32 %v895, %v1507
        %v1550 = vsub.f32 %v941, %v1510
        %v1551 = vsub.f32 %v987, %v1513
        %v1552 = vsub.f32 %v1033, %v1516
        %v1553 = vsub.f32 %v1079, %v1519
        %v1554 = vsub.f32 %v1125, %v1522
        %v1555 = vsub.f32 %v1171, %v1525
        %v1556 = vsub.f32 %v1217, %v1528
        %v1557 = vsub.f32 %v1263, %v1531
        %v1558 = vsub.f32 %v1309, %v1534
        %v1559 = vsub.f32 %v1355, %v1537
        %v1560 = vsub.f32 %v1401, %v1540
        %v1561 = vsub.f32 %v1447, %v1543
        %v1562 = vsub.f32 %v1493, %v1546
        %v1563 = vmul.f32 %v1547, 1.442695
        %v1564 = vpow.pop %v1563
        %v1565 = vmul.f32 %v1548, 1.442695
        %v1566 = vpow.pop %v1565
        %v1567 = vmul.f32 %v1549, 1.442695
        %v1568 = vpow.pop %v1567
        %v1569 = vmul.f32 %v1550, 1.442695
        %v1570 = vpow.pop %v1569
        %v1571 = vmul.f32 %v1551, 1.442695
        %v1572 = vpow.pop %v1571
        %v1573 = vmul.f32 %v1552, 1.442695
        %v1574 = vpow.pop %v1573
        %v1575 = vmul.f32 %v1553, 1.442695
        %v1576 = vpow.pop %v1575
        %v1577 = vmul.f32 %v1554, 1.442695
        %v1578 = vpow.pop %v1577
        %v1579 = vmul.f32 %v1555, 1.442695
        %v1580 = vpow.pop %v1579
        %v1581 = vmul.f32 %v1556, 1.442695
        %v1582 = vpow.pop %v1581
        %v1583 = vmul.f32 %v1557, 1.442695
        %v1584 = vpow.pop %v1583
        %v1585 = vmul.f32 %v1558, 1.442695
        %v1586 = vpow.pop %v1585
        %v1587 = vmul.f32 %v1559, 1.442695
        %v1588 = vpow.pop %v1587
        %v1589 = vmul.f32 %v1560, 1.442695
        %v1590 = vpow.pop %v1589
        %v1591 = vmul.f32 %v1561, 1.442695
        %v1592 = vpow.pop %v1591
        %v1593 = vmul.f32 %v1562, 1.442695
        %v1594 = vpow.pop %v1593
        %v1595 = vsel %vm1498, %v1564, 0.0
        %1596 = vadd.xlane.f32.xlu0 %v1595
        %v1597 = vpop.xlane.xlu0 %1596
        %v1598 = vsel %vm1498, %v1566, 0.0
        %1599 = vadd.xlane.f32.xlu0 %v1598
        %v1600 = vpop.xlane.xlu0 %1599
        %v1601 = vsel %vm1498, %v1568, 0.0
        %1602 = vadd.xlane.f32.xlu0 %v1601
        %v1603 = vpop.xlane.xlu0 %1602
        %v1604 = vsel %vm1498, %v1570, 0.0
        %1605 = vadd.xlane.f32.xlu0 %v1604
        %v1606 = vpop.xlane.xlu0 %1605
        %v1607 = vsel %vm1498, %v1572, 0.0
        %1608 = vadd.xlane.f32.xlu0 %v1607
        %v1609 = vpop.xlane.xlu0 %1608
        %v1610 = vsel %vm1498, %v1574, 0.0
        %1611 = vadd.xlane.f32.xlu0 %v1610
        %v1612 = vpop.xlane.xlu0 %1611
        %v1613 = vsel %vm1498, %v1576, 0.0
        %1614 = vadd.xlane.f32.xlu0 %v1613
        %v1615 = vpop.xlane.xlu0 %1614
        %v1616 = vsel %vm1498, %v1578, 0.0
        %1617 = vadd.xlane.f32.xlu0 %v1616
        %v1618 = vpop.xlane.xlu0 %1617
        %v1619 = vsel %vm1498, %v1580, 0.0
        %1620 = vadd.xlane.f32.xlu0 %v1619
        %v1621 = vpop.xlane.xlu0 %1620
        %v1622 = vsel %vm1498, %v1582, 0.0
        %1623 = vadd.xlane.f32.xlu0 %v1622
        %v1624 = vpop.xlane.xlu0 %1623
        %v1625 = vsel %vm1498, %v1584, 0.0
        %1626 = vadd.xlane.f32.xlu0 %v1625
        %v1627 = vpop.xlane.xlu0 %1626
        %v1628 = vsel %vm1498, %v1586, 0.0
        %1629 = vadd.xlane.f32.xlu0 %v1628
        %v1630 = vpop.xlane.xlu0 %1629
        %v1631 = vsel %vm1498, %v1588, 0.0
        %1632 = vadd.xlane.f32.xlu0 %v1631
        %v1633 = vpop.xlane.xlu0 %1632
        %v1634 = vsel %vm1498, %v1590, 0.0
        %1635 = vadd.xlane.f32.xlu0 %v1634
        %v1636 = vpop.xlane.xlu0 %1635
        %v1637 = vsel %vm1498, %v1592, 0.0
        %1638 = vadd.xlane.f32.xlu0 %v1637
        %v1639 = vpop.xlane.xlu0 %1638
        %v1640 = vsel %vm1498, %v1594, 0.0
        %1641 = vadd.xlane.f32.xlu0 %v1640
        %v1642 = vpop.xlane.xlu0 %1641
        %v1643 = vrcp.pop %v1597
        %v1644 = vrcp.pop %v1600
        %v1645 = vrcp.pop %v1603
        %v1646 = vrcp.pop %v1606
        %v1647 = vrcp.pop %v1609
        %v1648 = vrcp.pop %v1612
        %v1649 = vrcp.pop %v1615
        %v1650 = vrcp.pop %v1618
        %v1651 = vrcp.pop %v1621
        %v1652 = vrcp.pop %v1624
        %v1653 = vrcp.pop %v1627
        %v1654 = vrcp.pop %v1630
        %v1655 = vrcp.pop %v1633
        %v1656 = vrcp.pop %v1636
        %v1657 = vrcp.pop %v1639
        %v1658 = vrcp.pop %v1642
        %v1659 = vmul.f32 %v1564, %v1643
        %v1660 = vmul.f32 %v1566, %v1644
        %v1661 = vmul.f32 %v1568, %v1645
        %v1662 = vmul.f32 %v1570, %v1646
        %v1663 = vmul.f32 %v1572, %v1647
        %v1664 = vmul.f32 %v1574, %v1648
        %v1665 = vmul.f32 %v1576, %v1649
        %v1666 = vmul.f32 %v1578, %v1650
        %v1667 = vmul.f32 %v1580, %v1651
        %v1668 = vmul.f32 %v1582, %v1652
        %v1669 = vmul.f32 %v1584, %v1653
        %v1670 = vmul.f32 %v1586, %v1654
        %v1671 = vmul.f32 %v1588, %v1655
        %v1672 = vmul.f32 %v1590, %v1656
        %v1673 = vmul.f32 %v1592, %v1657
        %v1674 = vmul.f32 %v1594, %v1658
        %v1675 = vpack.c.bf16 %v1659, %v1659
        %v1676 = vpack.c.bf16 %v1660, %v1660
        %v1677 = vpack.c.bf16 %v1661, %v1661
        %v1678 = vpack.c.bf16 %v1662, %v1662
        %v1679 = vpack.c.bf16 %v1663, %v1663
        %v1680 = vpack.c.bf16 %v1664, %v1664
        %v1681 = vpack.c.bf16 %v1665, %v1665
        %v1682 = vpack.c.bf16 %v1666, %v1666
        %v1683 = vpack.c.bf16 %v1667, %v1667
        %v1684 = vpack.c.bf16 %v1668, %v1668
        %v1685 = vpack.c.bf16 %v1669, %v1669
        %v1686 = vpack.c.bf16 %v1670, %v1670
        %v1687 = vpack.c.bf16 %v1671, %v1671
        %v1688 = vpack.c.bf16 %v1672, %v1672
        %v1689 = vpack.c.bf16 %v1673, %v1673
        %v1690 = vpack.c.bf16 %v1674, %v1674
        %v1692 = vsel %vm1498, %v1675, 0
        %vm1694 = vcmask 1043456
        %v1696 = vsel %vm1694, %v745, 0
        %1698 = vmatprep.subr.bf16.mxu0 0
        %1699 = vmatpush1.bf16.msra.mxu0 %v1696
        %1700 = vmatprep.subr.bf16.mxu0 0
        %1701 = vmatpush1.bf16.msra.mxu0 0
        %1702 = vmatprep.subr.bf16.mxu0 0
        %1703 = vmatpush1.bf16.msra.mxu0 0
        %1704 = vmatprep.subr.bf16.mxu0 0
        %1705 = vmatpush1.bf16.msra.mxu0 0
        %1706 = vmatprep.subr.bf16.mxu0 0
        %1707 = vmatpush1.bf16.msra.mxu0 0
        %1708 = vmatprep.subr.bf16.mxu0 0
        %1709 = vmatpush1.bf16.msra.mxu0 0
        %1710 = vmatprep.subr.bf16.mxu0 0
        %1711 = vmatpush1.bf16.msra.mxu0 0
        %1712 = vmatprep.subr.bf16.mxu0 0
        %1713 = vmatpush1.bf16.msra.mxu0 0
        %1714 = vmatprep.subr.bf16.mxu0 0
        %1715 = vmatpush1.bf16.msra.mxu0 0
        %1716 = vmatprep.subr.bf16.mxu0 0
        %1717 = vmatpush1.bf16.msra.mxu0 0
        %1718 = vmatprep.subr.bf16.mxu0 0
        %1719 = vmatpush1.bf16.msra.mxu0 0
        %1720 = vmatprep.subr.bf16.mxu0 0
        %1721 = vmatpush1.bf16.msra.mxu0 0
        %1722 = vmatprep.subr.bf16.mxu0 0
        %1723 = vmatpush1.bf16.msra.mxu0 0
        %1724 = vmatprep.subr.bf16.mxu0 0
        %1725 = vmatpush1.bf16.msra.mxu0 0
        %1726 = vmatprep.subr.bf16.mxu0 0
        %1727 = vmatpush1.bf16.msra.mxu0 0
        %1728 = vmatprep.subr.bf16.mxu0 0
        %1729 = vmatpush1.bf16.msra.mxu0 0
        %1730 = vmatprep.mubr.bf16.mxu0 0
        %1731 = vmatmul.mubr.bf16.gmra.mrb[0].mxu0 %v1692
        %v1732 = vpop.f32.mrb[0].mxu0
        %v1733 = vadd.f32 0.0, %v1732
        %v1734 = vpop.f32.mrb[0].mxu0
        %v1735 = vpop.f32.mrb[0].mxu0
        %v1736 = vpop.f32.mrb[0].mxu0
        %1737 = vdwg.mxu0
        %v1739 = vsel %vm1498, %v1676, 0
        %v1742 = vsel %vm1694, %v746, 0
        %1744 = vmatprep.subr.bf16.mxu0 0
        %1745 = vmatpush1.bf16.msra.mxu0 %v1742
        %1746 = vmatprep.subr.bf16.mxu0 0
        %1747 = vmatpush1.bf16.msra.mxu0 0
        %1748 = vmatprep.subr.bf16.mxu0 0
        %1749 = vmatpush1.bf16.msra.mxu0 0
        %1750 = vmatprep.subr.bf16.mxu0 0
        %1751 = vmatpush1.bf16.msra.mxu0 0
        %1752 = vmatprep.subr.bf16.mxu0 0
        %1753 = vmatpush1.bf16.msra.mxu0 0
        %1754 = vmatprep.subr.bf16.mxu0 0
        %1755 = vmatpush1.bf16.msra.mxu0 0
        %1756 = vmatprep.subr.bf16.mxu0 0
        %1757 = vmatpush1.bf16.msra.mxu0 0
        %1758 = vmatprep.subr.bf16.mxu0 0
        %1759 = vmatpush1.bf16.msra.mxu0 0
        %1760 = vmatprep.subr.bf16.mxu0 0
        %1761 = vmatpush1.bf16.msra.mxu0 0
        %1762 = vmatprep.subr.bf16.mxu0 0
        %1763 = vmatpush1.bf16.msra.mxu0 0
        %1764 = vmatprep.subr.bf16.mxu0 0
        %1765 = vmatpush1.bf16.msra.mxu0 0
        %1766 = vmatprep.subr.bf16.mxu0 0
        %1767 = vmatpush1.bf16.msra.mxu0 0
        %1768 = vmatprep.subr.bf16.mxu0 0
        %1769 = vmatpush1.bf16.msra.mxu0 0
        %1770 = vmatprep.subr.bf16.mxu0 0
        %1771 = vmatpush1.bf16.msra.mxu0 0
        %1772 = vmatprep.subr.bf16.mxu0 0
        %1773 = vmatpush1.bf16.msra.mxu0 0
        %1774 = vmatprep.subr.bf16.mxu0 0
        %1775 = vmatpush1.bf16.msra.mxu0 0
        %1776 = vmatprep.mubr.bf16.mxu0 0
        %1777 = vmatmul.mubr.bf16.gmra.mrb[0].mxu0 %v1739
        %v1778 = vpop.f32.mrb[0].mxu0
        %v1779 = vadd.f32 0.0, %v1778
        %v1780 = vpop.f32.mrb[0].mxu0
        %v1781 = vpop.f32.mrb[0].mxu0
        %v1782 = vpop.f32.mrb[0].mxu0
        %1783 = vdwg.mxu0
        %v1785 = vsel %vm1498, %v1677, 0
        %v1788 = vsel %vm1694, %v747, 0
        %1790 = vmatprep.subr.bf16.mxu0 0
        %1791 = vmatpush1.bf16.msra.mxu0 %v1788
        %1792 = vmatprep.subr.bf16.mxu0 0
        %1793 = vmatpush1.bf16.msra.mxu0 0
        %1794 = vmatprep.subr.bf16.mxu0 0
        %1795 = vmatpush1.bf16.msra.mxu0 0
        %1796 = vmatprep.subr.bf16.mxu0 0
        %1797 = vmatpush1.bf16.msra.mxu0 0
        %1798 = vmatprep.subr.bf16.mxu0 0
        %1799 = vmatpush1.bf16.msra.mxu0 0
        %1800 = vmatprep.subr.bf16.mxu0 0
        %1801 = vmatpush1.bf16.msra.mxu0 0
        %1802 = vmatprep.subr.bf16.mxu0 0
        %1803 = vmatpush1.bf16.msra.mxu0 0
        %1804 = vmatprep.subr.bf16.mxu0 0
        %1805 = vmatpush1.bf16.msra.mxu0 0
        %1806 = vmatprep.subr.bf16.mxu0 0
        %1807 = vmatpush1.bf16.msra.mxu0 0
        %1808 = vmatprep.subr.bf16.mxu0 0
        %1809 = vmatpush1.bf16.msra.mxu0 0
        %1810 = vmatprep.subr.bf16.mxu0 0
        %1811 = vmatpush1.bf16.msra.mxu0 0
        %1812 = vmatprep.subr.bf16.mxu0 0
        %1813 = vmatpush1.bf16.msra.mxu0 0
        %1814 = vmatprep.subr.bf16.mxu0 0
        %1815 = vmatpush1.bf16.msra.mxu0 0
        %1816 = vmatprep.subr.bf16.mxu0 0
        %1817 = vmatpush1.bf16.msra.mxu0 0
        %1818 = vmatprep.subr.bf16.mxu0 0
        %1819 = vmatpush1.bf16.msra.mxu0 0
        %1820 = vmatprep.subr.bf16.mxu0 0
        %1821 = vmatpush1.bf16.msra.mxu0 0
        %1822 = vmatprep.mubr.bf16.mxu0 0
        %1823 = vmatmul.mubr.bf16.gmra.mrb[0].mxu0 %v1785
        %v1824 = vpop.f32.mrb[0].mxu0
        %v1825 = vadd.f32 0.0, %v1824
        %v1826 = vpop.f32.mrb[0].mxu0
        %v1827 = vpop.f32.mrb[0].mxu0
        %v1828 = vpop.f32.mrb[0].mxu0
        %1829 = vdwg.mxu0
        %v1831 = vsel %vm1498, %v1678, 0
        %v1834 = vsel %vm1694, %v748, 0
        %1836 = vmatprep.subr.bf16.mxu0 0
        %1837 = vmatpush1.bf16.msra.mxu0 %v1834
        %1838 = vmatprep.subr.bf16.mxu0 0
        %1839 = vmatpush1.bf16.msra.mxu0 0
        %1840 = vmatprep.subr.bf16.mxu0 0
        %1841 = vmatpush1.bf16.msra.mxu0 0
        %1842 = vmatprep.subr.bf16.mxu0 0
        %1843 = vmatpush1.bf16.msra.mxu0 0
        %1844 = vmatprep.subr.bf16.mxu0 0
        %1845 = vmatpush1.bf16.msra.mxu0 0
        %1846 = vmatprep.subr.bf16.mxu0 0
        %1847 = vmatpush1.bf16.msra.mxu0 0
        %1848 = vmatprep.subr.bf16.mxu0 0
        %1849 = vmatpush1.bf16.msra.mxu0 0
        %1850 = vmatprep.subr.bf16.mxu0 0
        %1851 = vmatpush1.bf16.msra.mxu0 0
        %1852 = vmatprep.subr.bf16.mxu0 0
        %1853 = vmatpush1.bf16.msra.mxu0 0
        %1854 = vmatprep.subr.bf16.mxu0 0
        %1855 = vmatpush1.bf16.msra.mxu0 0
        %1856 = vmatprep.subr.bf16.mxu0 0
        %1857 = vmatpush1.bf16.msra.mxu0 0
        %1858 = vmatprep.subr.bf16.mxu0 0
        %1859 = vmatpush1.bf16.msra.mxu0 0
        %1860 = vmatprep.subr.bf16.mxu0 0
        %1861 = vmatpush1.bf16.msra.mxu0 0
        %1862 = vmatprep.subr.bf16.mxu0 0
        %1863 = vmatpush1.bf16.msra.mxu0 0
        %1864 = vmatprep.subr.bf16.mxu0 0
        %1865 = vmatpush1.bf16.msra.mxu0 0
        %1866 = vmatprep.subr.bf16.mxu0 0
        %1867 = vmatpush1.bf16.msra.mxu0 0
        %1868 = vmatprep.mubr.bf16.mxu0 0
        %1869 = vmatmul.mubr.bf16.gmra.mrb[0].mxu0 %v1831
        %v1870 = vpop.f32.mrb[0].mxu0
        %v1871 = vadd.f32 0.0, %v1870
        %v1872 = vpop.f32.mrb[0].mxu0
        %v1873 = vpop.f32.mrb[0].mxu0
        %v1874 = vpop.f32.mrb[0].mxu0
        %1875 = vdwg.mxu0
        %v1877 = vsel %vm1498, %v1679, 0
        %v1880 = vsel %vm1694, %v749, 0
        %1882 = vmatprep.subr.bf16.mxu0 0
        %1883 = vmatpush1.bf16.msra.mxu0 %v1880
        %1884 = vmatprep.subr.bf16.mxu0 0
        %1885 = vmatpush1.bf16.msra.mxu0 0
        %1886 = vmatprep.subr.bf16.mxu0 0
        %1887 = vmatpush1.bf16.msra.mxu0 0
        %1888 = vmatprep.subr.bf16.mxu0 0
        %1889 = vmatpush1.bf16.msra.mxu0 0
        %1890 = vmatprep.subr.bf16.mxu0 0
        %1891 = vmatpush1.bf16.msra.mxu0 0
        %1892 = vmatprep.subr.bf16.mxu0 0
        %1893 = vmatpush1.bf16.msra.mxu0 0
        %1894 = vmatprep.subr.bf16.mxu0 0
        %1895 = vmatpush1.bf16.msra.mxu0 0
        %1896 = vmatprep.subr.bf16.mxu0 0
        %1897 = vmatpush1.bf16.msra.mxu0 0
        %1898 = vmatprep.subr.bf16.mxu0 0
        %1899 = vmatpush1.bf16.msra.mxu0 0
        %1900 = vmatprep.subr.bf16.mxu0 0
        %1901 = vmatpush1.bf16.msra.mxu0 0
        %1902 = vmatprep.subr.bf16.mxu0 0
        %1903 = vmatpush1.bf16.msra.mxu0 0
        %1904 = vmatprep.subr.bf16.mxu0 0
        %1905 = vmatpush1.bf16.msra.mxu0 0
        %1906 = vmatprep.subr.bf16.mxu0 0
        %1907 = vmatpush1.bf16.msra.mxu0 0
        %1908 = vmatprep.subr.bf16.mxu0 0
        %1909 = vmatpush1.bf16.msra.mxu0 0
        %1910 = vmatprep.subr.bf16.mxu0 0
        %1911 = vmatpush1.bf16.msra.mxu0 0
        %1912 = vmatprep.subr.bf16.mxu0 0
        %1913 = vmatpush1.bf16.msra.mxu0 0
        %1914 = vmatprep.mubr.bf16.mxu0 0
        %1915 = vmatmul.mubr.bf16.gmra.mrb[0].mxu0 %v1877
        %v1916 = vpop.f32.mrb[0].mxu0
        %v1917 = vadd.f32 0.0, %v1916
        %v1918 = vpop.f32.mrb[0].mxu0
        %v1919 = vpop.f32.mrb[0].mxu0
        %v1920 = vpop.f32.mrb[0].mxu0
        %1921 = vdwg.mxu0
        %v1923 = vsel %vm1498, %v1680, 0
        %v1926 = vsel %vm1694, %v750, 0
        %1928 = vmatprep.subr.bf16.mxu0 0
        %1929 = vmatpush1.bf16.msra.mxu0 %v1926
        %1930 = vmatprep.subr.bf16.mxu0 0
        %1931 = vmatpush1.bf16.msra.mxu0 0
        %1932 = vmatprep.subr.bf16.mxu0 0
        %1933 = vmatpush1.bf16.msra.mxu0 0
        %1934 = vmatprep.subr.bf16.mxu0 0
        %1935 = vmatpush1.bf16.msra.mxu0 0
        %1936 = vmatprep.subr.bf16.mxu0 0
        %1937 = vmatpush1.bf16.msra.mxu0 0
        %1938 = vmatprep.subr.bf16.mxu0 0
        %1939 = vmatpush1.bf16.msra.mxu0 0
        %1940 = vmatprep.subr.bf16.mxu0 0
        %1941 = vmatpush1.bf16.msra.mxu0 0
        %1942 = vmatprep.subr.bf16.mxu0 0
        %1943 = vmatpush1.bf16.msra.mxu0 0
        %1944 = vmatprep.subr.bf16.mxu0 0
        %1945 = vmatpush1.bf16.msra.mxu0 0
        %1946 = vmatprep.subr.bf16.mxu0 0
        %1947 = vmatpush1.bf16.msra.mxu0 0
        %1948 = vmatprep.subr.bf16.mxu0 0
        %1949 = vmatpush1.bf16.msra.mxu0 0
        %1950 = vmatprep.subr.bf16.mxu0 0
        %1951 = vmatpush1.bf16.msra.mxu0 0
        %1952 = vmatprep.subr.bf16.mxu0 0
        %1953 = vmatpush1.bf16.msra.mxu0 0
        %1954 = vmatprep.subr.bf16.mxu0 0
        %1955 = vmatpush1.bf16.msra.mxu0 0
        %1956 = vmatprep.subr.bf16.mxu0 0
        %1957 = vmatpush1.bf16.msra.mxu0 0
        %1958 = vmatprep.subr.bf16.mxu0 0
        %1959 = vmatpush1.bf16.msra.mxu0 0
        %1960 = vmatprep.mubr.bf16.mxu0 0
        %1961 = vmatmul.mubr.bf16.gmra.mrb[0].mxu0 %v1923
        %v1962 = vpop.f32.mrb[0].mxu0
        %v1963 = vadd.f32 0.0, %v1962
        %v1964 = vpop.f32.mrb[0].mxu0
        %v1965 = vpop.f32.mrb[0].mxu0
        %v1966 = vpop.f32.mrb[0].mxu0
        %1967 = vdwg.mxu0
        %v1969 = vsel %vm1498, %v1681, 0
        %v1972 = vsel %vm1694, %v751, 0
        %1974 = vmatprep.subr.bf16.mxu0 0
        %1975 = vmatpush1.bf16.msra.mxu0 %v1972
        %1976 = vmatprep.subr.bf16.mxu0 0
        %1977 = vmatpush1.bf16.msra.mxu0 0
        %1978 = vmatprep.subr.bf16.mxu0 0
        %1979 = vmatpush1.bf16.msra.mxu0 0
        %1980 = vmatprep.subr.bf16.mxu0 0
        %1981 = vmatpush1.bf16.msra.mxu0 0
        %1982 = vmatprep.subr.bf16.mxu0 0
        %1983 = vmatpush1.bf16.msra.mxu0 0
        %1984 = vmatprep.subr.bf16.mxu0 0
        %1985 = vmatpush1.bf16.msra.mxu0 0
        %1986 = vmatprep.subr.bf16.mxu0 0
        %1987 = vmatpush1.bf16.msra.mxu0 0
        %1988 = vmatprep.subr.bf16.mxu0 0
        %1989 = vmatpush1.bf16.msra.mxu0 0
        %1990 = vmatprep.subr.bf16.mxu0 0
        %1991 = vmatpush1.bf16.msra.mxu0 0
        %1992 = vmatprep.subr.bf16.mxu0 0
        %1993 = vmatpush1.bf16.msra.mxu0 0
        %1994 = vmatprep.subr.bf16.mxu0 0
        %1995 = vmatpush1.bf16.msra.mxu0 0
        %1996 = vmatprep.subr.bf16.mxu0 0
        %1997 = vmatpush1.bf16.msra.mxu0 0
        %1998 = vmatprep.subr.bf16.mxu0 0
        %1999 = vmatpush1.bf16.msra.mxu0 0
        %2000 = vmatprep.subr.bf16.mxu0 0
        %2001 = vmatpush1.bf16.msra.mxu0 0
        %2002 = vmatprep.subr.bf16.mxu0 0
        %2003 = vmatpush1.bf16.msra.mxu0 0
        %2004 = vmatprep.subr.bf16.mxu0 0
        %2005 = vmatpush1.bf16.msra.mxu0 0
        %2006 = vmatprep.mubr.bf16.mxu0 0
        %2007 = vmatmul.mubr.bf16.gmra.mrb[0].mxu0 %v1969
        %v2008 = vpop.f32.mrb[0].mxu0
        %v2009 = vadd.f32 0.0, %v2008
        %v2010 = vpop.f32.mrb[0].mxu0
        %v2011 = vpop.f32.mrb[0].mxu0
        %v2012 = vpop.f32.mrb[0].mxu0
        %2013 = vdwg.mxu0
        %v2015 = vsel %vm1498, %v1682, 0
        %v2018 = vsel %vm1694, %v752, 0
        %2020 = vmatprep.subr.bf16.mxu0 0
        %2021 = vmatpush1.bf16.msra.mxu0 %v2018
        %2022 = vmatprep.subr.bf16.mxu0 0
        %2023 = vmatpush1.bf16.msra.mxu0 0
        %2024 = vmatprep.subr.bf16.mxu0 0
        %2025 = vmatpush1.bf16.msra.mxu0 0
        %2026 = vmatprep.subr.bf16.mxu0 0
        %2027 = vmatpush1.bf16.msra.mxu0 0
        %2028 = vmatprep.subr.bf16.mxu0 0
        %2029 = vmatpush1.bf16.msra.mxu0 0
        %2030 = vmatprep.subr.bf16.mxu0 0
        %2031 = vmatpush1.bf16.msra.mxu0 0
        %2032 = vmatprep.subr.bf16.mxu0 0
        %2033 = vmatpush1.bf16.msra.mxu0 0
        %2034 = vmatprep.subr.bf16.mxu0 0
        %2035 = vmatpush1.bf16.msra.mxu0 0
        %2036 = vmatprep.subr.bf16.mxu0 0
        %2037 = vmatpush1.bf16.msra.mxu0 0
        %2038 = vmatprep.subr.bf16.mxu0 0
        %2039 = vmatpush1.bf16.msra.mxu0 0
        %2040 = vmatprep.subr.bf16.mxu0 0
        %2041 = vmatpush1.bf16.msra.mxu0 0
        %2042 = vmatprep.subr.bf16.mxu0 0
        %2043 = vmatpush1.bf16.msra.mxu0 0
        %2044 = vmatprep.subr.bf16.mxu0 0
        %2045 = vmatpush1.bf16.msra.mxu0 0
        %2046 = vmatprep.subr.bf16.mxu0 0
        %2047 = vmatpush1.bf16.msra.mxu0 0
        %2048 = vmatprep.subr.bf16.mxu0 0
        %2049 = vmatpush1.bf16.msra.mxu0 0
        %2050 = vmatprep.subr.bf16.mxu0 0
        %2051 = vmatpush1.bf16.msra.mxu0 0
        %2052 = vmatprep.mubr.bf16.mxu0 0
        %2053 = vmatmul.mubr.bf16.gmra.mrb[0].mxu0 %v2015
        %v2054 = vpop.f32.mrb[0].mxu0
        %v2055 = vadd.f32 0.0, %v2054
        %v2056 = vpop.f32.mrb[0].mxu0
        %v2057 = vpop.f32.mrb[0].mxu0
        %v2058 = vpop.f32.mrb[0].mxu0
        %2059 = vdwg.mxu0
        %v2061 = vsel %vm1498, %v1683, 0
        %v2064 = vsel %vm1694, %v753, 0
        %2066 = vmatprep.subr.bf16.mxu0 0
        %2067 = vmatpush1.bf16.msra.mxu0 %v2064
        %2068 = vmatprep.subr.bf16.mxu0 0
        %2069 = vmatpush1.bf16.msra.mxu0 0
        %2070 = vmatprep.subr.bf16.mxu0 0
        %2071 = vmatpush1.bf16.msra.mxu0 0
        %2072 = vmatprep.subr.bf16.mxu0 0
        %2073 = vmatpush1.bf16.msra.mxu0 0
        %2074 = vmatprep.subr.bf16.mxu0 0
        %2075 = vmatpush1.bf16.msra.mxu0 0
        %2076 = vmatprep.subr.bf16.mxu0 0
        %2077 = vmatpush1.bf16.msra.mxu0 0
        %2078 = vmatprep.subr.bf16.mxu0 0
        %2079 = vmatpush1.bf16.msra.mxu0 0
        %2080 = vmatprep.subr.bf16.mxu0 0
        %2081 = vmatpush1.bf16.msra.mxu0 0
        %2082 = vmatprep.subr.bf16.mxu0 0
        %2083 = vmatpush1.bf16.msra.mxu0 0
        %2084 = vmatprep.subr.bf16.mxu0 0
        %2085 = vmatpush1.bf16.msra.mxu0 0
        %2086 = vmatprep.subr.bf16.mxu0 0
        %2087 = vmatpush1.bf16.msra.mxu0 0
        %2088 = vmatprep.subr.bf16.mxu0 0
        %2089 = vmatpush1.bf16.msra.mxu0 0
        %2090 = vmatprep.subr.bf16.mxu0 0
        %2091 = vmatpush1.bf16.msra.mxu0 0
        %2092 = vmatprep.subr.bf16.mxu0 0
        %2093 = vmatpush1.bf16.msra.mxu0 0
        %2094 = vmatprep.subr.bf16.mxu0 0
        %2095 = vmatpush1.bf16.msra.mxu0 0
        %2096 = vmatprep.subr.bf16.mxu0 0
        %2097 = vmatpush1.bf16.msra.mxu0 0
        %2098 = vmatprep.mubr.bf16.mxu0 0
        %2099 = vmatmul.mubr.bf16.gmra.mrb[0].mxu0 %v2061
        %v2100 = vpop.f32.mrb[0].mxu0
        %v2101 = vadd.f32 0.0, %v2100
        %v2102 = vpop.f32.mrb[0].mxu0
        %v2103 = vpop.f32.mrb[0].mxu0
        %v2104 = vpop.f32.mrb[0].mxu0
        %2105 = vdwg.mxu0
        %v2107 = vsel %vm1498, %v1684, 0
        %v2110 = vsel %vm1694, %v754, 0
        %2112 = vmatprep.subr.bf16.mxu0 0
        %2113 = vmatpush1.bf16.msra.mxu0 %v2110
        %2114 = vmatprep.subr.bf16.mxu0 0
        %2115 = vmatpush1.bf16.msra.mxu0 0
        %2116 = vmatprep.subr.bf16.mxu0 0
        %2117 = vmatpush1.bf16.msra.mxu0 0
        %2118 = vmatprep.subr.bf16.mxu0 0
        %2119 = vmatpush1.bf16.msra.mxu0 0
        %2120 = vmatprep.subr.bf16.mxu0 0
        %2121 = vmatpush1.bf16.msra.mxu0 0
        %2122 = vmatprep.subr.bf16.mxu0 0
        %2123 = vmatpush1.bf16.msra.mxu0 0
        %2124 = vmatprep.subr.bf16.mxu0 0
        %2125 = vmatpush1.bf16.msra.mxu0 0
        %2126 = vmatprep.subr.bf16.mxu0 0
        %2127 = vmatpush1.bf16.msra.mxu0 0
        %2128 = vmatprep.subr.bf16.mxu0 0
        %2129 = vmatpush1.bf16.msra.mxu0 0
        %2130 = vmatprep.subr.bf16.mxu0 0
        %2131 = vmatpush1.bf16.msra.mxu0 0
        %2132 = vmatprep.subr.bf16.mxu0 0
        %2133 = vmatpush1.bf16.msra.mxu0 0
        %2134 = vmatprep.subr.bf16.mxu0 0
        %2135 = vmatpush1.bf16.msra.mxu0 0
        %2136 = vmatprep.subr.bf16.mxu0 0
        %2137 = vmatpush1.bf16.msra.mxu0 0
        %2138 = vmatprep.subr.bf16.mxu0 0
        %2139 = vmatpush1.bf16.msra.mxu0 0
        %2140 = vmatprep.subr.bf16.mxu0 0
        %2141 = vmatpush1.bf16.msra.mxu0 0
        %2142 = vmatprep.subr.bf16.mxu0 0
        %2143 = vmatpush1.bf16.msra.mxu0 0
        %2144 = vmatprep.mubr.bf16.mxu0 0
        %2145 = vmatmul.mubr.bf16.gmra.mrb[0].mxu0 %v2107
        %v2146 = vpop.f32.mrb[0].mxu0
        %v2147 = vadd.f32 0.0, %v2146
        %v2148 = vpop.f32.mrb[0].mxu0
        %v2149 = vpop.f32.mrb[0].mxu0
        %v2150 = vpop.f32.mrb[0].mxu0
        %2151 = vdwg.mxu0
        %v2153 = vsel %vm1498, %v1685, 0
        %v2156 = vsel %vm1694, %v755, 0
        %2158 = vmatprep.subr.bf16.mxu0 0
        %2159 = vmatpush1.bf16.msra.mxu0 %v2156
        %2160 = vmatprep.subr.bf16.mxu0 0
        %2161 = vmatpush1.bf16.msra.mxu0 0
        %2162 = vmatprep.subr.bf16.mxu0 0
        %2163 = vmatpush1.bf16.msra.mxu0 0
        %2164 = vmatprep.subr.bf16.mxu0 0
        %2165 = vmatpush1.bf16.msra.mxu0 0
        %2166 = vmatprep.subr.bf16.mxu0 0
        %2167 = vmatpush1.bf16.msra.mxu0 0
        %2168 = vmatprep.subr.bf16.mxu0 0
        %2169 = vmatpush1.bf16.msra.mxu0 0
        %2170 = vmatprep.subr.bf16.mxu0 0
        %2171 = vmatpush1.bf16.msra.mxu0 0
        %2172 = vmatprep.subr.bf16.mxu0 0
        %2173 = vmatpush1.bf16.msra.mxu0 0
        %2174 = vmatprep.subr.bf16.mxu0 0
        %2175 = vmatpush1.bf16.msra.mxu0 0
        %2176 = vmatprep.subr.bf16.mxu0 0
        %2177 = vmatpush1.bf16.msra.mxu0 0
        %2178 = vmatprep.subr.bf16.mxu0 0
        %2179 = vmatpush1.bf16.msra.mxu0 0
        %2180 = vmatprep.subr.bf16.mxu0 0
        %2181 = vmatpush1.bf16.msra.mxu0 0
        %2182 = vmatprep.subr.bf16.mxu0 0
        %2183 = vmatpush1.bf16.msra.mxu0 0
        %2184 = vmatprep.subr.bf16.mxu0 0
        %2185 = vmatpush1.bf16.msra.mxu0 0
        %2186 = vmatprep.subr.bf16.mxu0 0
        %2187 = vmatpush1.bf16.msra.mxu0 0
        %2188 = vmatprep.subr.bf16.mxu0 0
        %2189 = vmatpush1.bf16.msra.mxu0 0
        %2190 = vmatprep.mubr.bf16.mxu0 0
        %2191 = vmatmul.mubr.bf16.gmra.mrb[0].mxu0 %v2153
        %v2192 = vpop.f32.mrb[0].mxu0
        %v2193 = vadd.f32 0.0, %v2192
        %v2194 = vpop.f32.mrb[0].mxu0
        %v2195 = vpop.f32.mrb[0].mxu0
        %v2196 = vpop.f32.mrb[0].mxu0
        %2197 = vdwg.mxu0
        %v2199 = vsel %vm1498, %v1686, 0
        %v2202 = vsel %vm1694, %v756, 0
        %2204 = vmatprep.subr.bf16.mxu0 0
        %2205 = vmatpush1.bf16.msra.mxu0 %v2202
        %2206 = vmatprep.subr.bf16.mxu0 0
        %2207 = vmatpush1.bf16.msra.mxu0 0
        %2208 = vmatprep.subr.bf16.mxu0 0
        %2209 = vmatpush1.bf16.msra.mxu0 0
        %2210 = vmatprep.subr.bf16.mxu0 0
        %2211 = vmatpush1.bf16.msra.mxu0 0
        %2212 = vmatprep.subr.bf16.mxu0 0
        %2213 = vmatpush1.bf16.msra.mxu0 0
        %2214 = vmatprep.subr.bf16.mxu0 0
        %2215 = vmatpush1.bf16.msra.mxu0 0
        %2216 = vmatprep.subr.bf16.mxu0 0
        %2217 = vmatpush1.bf16.msra.mxu0 0
        %2218 = vmatprep.subr.bf16.mxu0 0
        %2219 = vmatpush1.bf16.msra.mxu0 0
        %2220 = vmatprep.subr.bf16.mxu0 0
        %2221 = vmatpush1.bf16.msra.mxu0 0
        %2222 = vmatprep.subr.bf16.mxu0 0
        %2223 = vmatpush1.bf16.msra.mxu0 0
        %2224 = vmatprep.subr.bf16.mxu0 0
        %2225 = vmatpush1.bf16.msra.mxu0 0
        %2226 = vmatprep.subr.bf16.mxu0 0
        %2227 = vmatpush1.bf16.msra.mxu0 0
        %2228 = vmatprep.subr.bf16.mxu0 0
        %2229 = vmatpush1.bf16.msra.mxu0 0
        %2230 = vmatprep.subr.bf16.mxu0 0
        %2231 = vmatpush1.bf16.msra.mxu0 0
        %2232 = vmatprep.subr.bf16.mxu0 0
        %2233 = vmatpush1.bf16.msra.mxu0 0
        %2234 = vmatprep.subr.bf16.mxu0 0
        %2235 = vmatpush1.bf16.msra.mxu0 0
        %2236 = vmatprep.mubr.bf16.mxu0 0
        %2237 = vmatmul.mubr.bf16.gmra.mrb[0].mxu0 %v2199
        %v2238 = vpop.f32.mrb[0].mxu0
        %v2239 = vadd.f32 0.0, %v2238
        %v2240 = vpop.f32.mrb[0].mxu0
        %v2241 = vpop.f32.mrb[0].mxu0
        %v2242 = vpop.f32.mrb[0].mxu0
        %2243 = vdwg.mxu0
        %v2245 = vsel %vm1498, %v1687, 0
        %v2248 = vsel %vm1694, %v757, 0
        %2250 = vmatprep.subr.bf16.mxu0 0
        %2251 = vmatpush1.bf16.msra.mxu0 %v2248
        %2252 = vmatprep.subr.bf16.mxu0 0
        %2253 = vmatpush1.bf16.msra.mxu0 0
        %2254 = vmatprep.subr.bf16.mxu0 0
        %2255 = vmatpush1.bf16.msra.mxu0 0
        %2256 = vmatprep.subr.bf16.mxu0 0
        %2257 = vmatpush1.bf16.msra.mxu0 0
        %2258 = vmatprep.subr.bf16.mxu0 0
        %2259 = vmatpush1.bf16.msra.mxu0 0
        %2260 = vmatprep.subr.bf16.mxu0 0
        %2261 = vmatpush1.bf16.msra.mxu0 0
        %2262 = vmatprep.subr.bf16.mxu0 0
        %2263 = vmatpush1.bf16.msra.mxu0 0
        %2264 = vmatprep.subr.bf16.mxu0 0
        %2265 = vmatpush1.bf16.msra.mxu0 0
        %2266 = vmatprep.subr.bf16.mxu0 0
        %2267 = vmatpush1.bf16.msra.mxu0 0
        %2268 = vmatprep.subr.bf16.mxu0 0
        %2269 = vmatpush1.bf16.msra.mxu0 0
        %2270 = vmatprep.subr.bf16.mxu0 0
        %2271 = vmatpush1.bf16.msra.mxu0 0
        %2272 = vmatprep.subr.bf16.mxu0 0
        %2273 = vmatpush1.bf16.msra.mxu0 0
        %2274 = vmatprep.subr.bf16.mxu0 0
        %2275 = vmatpush1.bf16.msra.mxu0 0
        %2276 = vmatprep.subr.bf16.mxu0 0
        %2277 = vmatpush1.bf16.msra.mxu0 0
        %2278 = vmatprep.subr.bf16.mxu0 0
        %2279 = vmatpush1.bf16.msra.mxu0 0
        %2280 = vmatprep.subr.bf16.mxu0 0
        %2281 = vmatpush1.bf16.msra.mxu0 0
        %2282 = vmatprep.mubr.bf16.mxu0 0
        %2283 = vmatmul.mubr.bf16.gmra.mrb[0].mxu0 %v2245
        %v2284 = vpop.f32.mrb[0].mxu0
        %v2285 = vadd.f32 0.0, %v2284
        %v2286 = vpop.f32.mrb[0].mxu0
        %v2287 = vpop.f32.mrb[0].mxu0
        %v2288 = vpop.f32.mrb[0].mxu0
        %2289 = vdwg.mxu0
        %v2291 = vsel %vm1498, %v1688, 0
        %v2294 = vsel %vm1694, %v758, 0
        %2296 = vmatprep.subr.bf16.mxu0 0
        %2297 = vmatpush1.bf16.msra.mxu0 %v2294
        %2298 = vmatprep.subr.bf16.mxu0 0
        %2299 = vmatpush1.bf16.msra.mxu0 0
        %2300 = vmatprep.subr.bf16.mxu0 0
        %2301 = vmatpush1.bf16.msra.mxu0 0
        %2302 = vmatprep.subr.bf16.mxu0 0
        %2303 = vmatpush1.bf16.msra.mxu0 0
        %2304 = vmatprep.subr.bf16.mxu0 0
        %2305 = vmatpush1.bf16.msra.mxu0 0
        %2306 = vmatprep.subr.bf16.mxu0 0
        %2307 = vmatpush1.bf16.msra.mxu0 0
        %2308 = vmatprep.subr.bf16.mxu0 0
        %2309 = vmatpush1.bf16.msra.mxu0 0
        %2310 = vmatprep.subr.bf16.mxu0 0
        %2311 = vmatpush1.bf16.msra.mxu0 0
        %2312 = vmatprep.subr.bf16.mxu0 0
        %2313 = vmatpush1.bf16.msra.mxu0 0
        %2314 = vmatprep.subr.bf16.mxu0 0
        %2315 = vmatpush1.bf16.msra.mxu0 0
        %2316 = vmatprep.subr.bf16.mxu0 0
        %2317 = vmatpush1.bf16.msra.mxu0 0
        %2318 = vmatprep.subr.bf16.mxu0 0
        %2319 = vmatpush1.bf16.msra.mxu0 0
        %2320 = vmatprep.subr.bf16.mxu0 0
        %2321 = vmatpush1.bf16.msra.mxu0 0
        %2322 = vmatprep.subr.bf16.mxu0 0
        %2323 = vmatpush1.bf16.msra.mxu0 0
        %2324 = vmatprep.subr.bf16.mxu0 0
        %2325 = vmatpush1.bf16.msra.mxu0 0
        %2326 = vmatprep.subr.bf16.mxu0 0
        %2327 = vmatpush1.bf16.msra.mxu0 0
        %2328 = vmatprep.mubr.bf16.mxu0 0
        %2329 = vmatmul.mubr.bf16.gmra.mrb[0].mxu0 %v2291
        %v2330 = vpop.f32.mrb[0].mxu0
        %v2331 = vadd.f32 0.0, %v2330
        %v2332 = vpop.f32.mrb[0].mxu0
        %v2333 = vpop.f32.mrb[0].mxu0
        %v2334 = vpop.f32.mrb[0].mxu0
        %2335 = vdwg.mxu0
        %v2337 = vsel %vm1498, %v1689, 0
        %v2340 = vsel %vm1694, %v759, 0
        %2342 = vmatprep.subr.bf16.mxu0 0
        %2343 = vmatpush1.bf16.msra.mxu0 %v2340
        %2344 = vmatprep.subr.bf16.mxu0 0
        %2345 = vmatpush1.bf16.msra.mxu0 0
        %2346 = vmatprep.subr.bf16.mxu0 0
        %2347 = vmatpush1.bf16.msra.mxu0 0
        %2348 = vmatprep.subr.bf16.mxu0 0
        %2349 = vmatpush1.bf16.msra.mxu0 0
        %2350 = vmatprep.subr.bf16.mxu0 0
        %2351 = vmatpush1.bf16.msra.mxu0 0
        %2352 = vmatprep.subr.bf16.mxu0 0
        %2353 = vmatpush1.bf16.msra.mxu0 0
        %2354 = vmatprep.subr.bf16.mxu0 0
        %2355 = vmatpush1.bf16.msra.mxu0 0
        %2356 = vmatprep.subr.bf16.mxu0 0
        %2357 = vmatpush1.bf16.msra.mxu0 0
        %2358 = vmatprep.subr.bf16.mxu0 0
        %2359 = vmatpush1.bf16.msra.mxu0 0
        %2360 = vmatprep.subr.bf16.mxu0 0
        %2361 = vmatpush1.bf16.msra.mxu0 0
        %2362 = vmatprep.subr.bf16.mxu0 0
        %2363 = vmatpush1.bf16.msra.mxu0 0
        %2364 = vmatprep.subr.bf16.mxu0 0
        %2365 = vmatpush1.bf16.msra.mxu0 0
        %2366 = vmatprep.subr.bf16.mxu0 0
        %2367 = vmatpush1.bf16.msra.mxu0 0
        %2368 = vmatprep.subr.bf16.mxu0 0
        %2369 = vmatpush1.bf16.msra.mxu0 0
        %2370 = vmatprep.subr.bf16.mxu0 0
        %2371 = vmatpush1.bf16.msra.mxu0 0
        %2372 = vmatprep.subr.bf16.mxu0 0
        %2373 = vmatpush1.bf16.msra.mxu0 0
        %2374 = vmatprep.mubr.bf16.mxu0 0
        %2375 = vmatmul.mubr.bf16.gmra.mrb[0].mxu0 %v2337
        %v2376 = vpop.f32.mrb[0].mxu0
        %v2377 = vadd.f32 0.0, %v2376
        %v2378 = vpop.f32.mrb[0].mxu0
        %v2379 = vpop.f32.mrb[0].mxu0
        %v2380 = vpop.f32.mrb[0].mxu0
        %2381 = vdwg.mxu0
        %v2383 = vsel %vm1498, %v1690, 0
        %v2386 = vsel %vm1694, %v760, 0
        %2388 = vmatprep.subr.bf16.mxu0 0
        %2389 = vmatpush1.bf16.msra.mxu0 %v2386
        %2390 = vmatprep.subr.bf16.mxu0 0
        %2391 = vmatpush1.bf16.msra.mxu0 0
        %2392 = vmatprep.subr.bf16.mxu0 0
        %2393 = vmatpush1.bf16.msra.mxu0 0
        %2394 = vmatprep.subr.bf16.mxu0 0
        %2395 = vmatpush1.bf16.msra.mxu0 0
        %2396 = vmatprep.subr.bf16.mxu0 0
        %2397 = vmatpush1.bf16.msra.mxu0 0
        %2398 = vmatprep.subr.bf16.mxu0 0
        %2399 = vmatpush1.bf16.msra.mxu0 0
        %2400 = vmatprep.subr.bf16.mxu0 0
        %2401 = vmatpush1.bf16.msra.mxu0 0
        %2402 = vmatprep.subr.bf16.mxu0 0
        %2403 = vmatpush1.bf16.msra.mxu0 0
        %2404 = vmatprep.subr.bf16.mxu0 0
        %2405 = vmatpush1.bf16.msra.mxu0 0
        %2406 = vmatprep.subr.bf16.mxu0 0
        %2407 = vmatpush1.bf16.msra.mxu0 0
        %2408 = vmatprep.subr.bf16.mxu0 0
        %2409 = vmatpush1.bf16.msra.mxu0 0
        %2410 = vmatprep.subr.bf16.mxu0 0
        %2411 = vmatpush1.bf16.msra.mxu0 0
        %2412 = vmatprep.subr.bf16.mxu0 0
        %2413 = vmatpush1.bf16.msra.mxu0 0
        %2414 = vmatprep.subr.bf16.mxu0 0
        %2415 = vmatpush1.bf16.msra.mxu0 0
        %2416 = vmatprep.subr.bf16.mxu0 0
        %2417 = vmatpush1.bf16.msra.mxu0 0
        %2418 = vmatprep.subr.bf16.mxu0 0
        %2419 = vmatpush1.bf16.msra.mxu0 0
        %2420 = vmatprep.mubr.bf16.mxu0 0
        %2421 = vmatmul.mubr.bf16.gmra.mrb[0].mxu0 %v2383
        %v2422 = vpop.f32.mrb[0].mxu0
        %v2423 = vadd.f32 0.0, %v2422
        %v2424 = vpop.f32.mrb[0].mxu0
        %v2425 = vpop.f32.mrb[0].mxu0
        %v2426 = vpop.f32.mrb[0].mxu0
        %2427 = vdwg.mxu0
        %2432 = vrot.lane.b32.xlu0 %v1917, 32
        %v2433 = vpop.permute.xlu0 %2432
        %2434 = vrot.lane.b32.xlu0 %v1963, 32
        %v2435 = vpop.permute.xlu0 %2434
        %2436 = vrot.lane.b32.xlu0 %v2009, 32
        %v2437 = vpop.permute.xlu0 %2436
        %2438 = vrot.lane.b32.xlu0 %v2055, 32
        %v2439 = vpop.permute.xlu0 %2438
        %2448 = vrot.lane.b32.xlu0 %v2101, 64
        %v2449 = vpop.permute.xlu0 %2448
        %2450 = vrot.lane.b32.xlu0 %v2147, 64
        %v2451 = vpop.permute.xlu0 %2450
        %2452 = vrot.lane.b32.xlu0 %v2193, 64
        %v2453 = vpop.permute.xlu0 %2452
        %2454 = vrot.lane.b32.xlu0 %v2239, 64
        %v2455 = vpop.permute.xlu0 %2454
        %2464 = vrot.lane.b32.xlu0 %v2285, 96
        %v2465 = vpop.permute.xlu0 %2464
        %2466 = vrot.lane.b32.xlu0 %v2331, 96
        %v2467 = vpop.permute.xlu0 %2466
        %2468 = vrot.lane.b32.xlu0 %v2377, 96
        %v2469 = vpop.permute.xlu0 %2468
        %2470 = vrot.lane.b32.xlu0 %v2423, 96
        %v2471 = vpop.permute.xlu0 %2470
        %v2476 = vsel %vm761, %v1733, %v2433
        %v2477 = vsel %vm761, %v1779, %v2435
        %v2478 = vsel %vm761, %v1825, %v2437
        %v2479 = vsel %vm761, %v1871, %v2439
        %vm2480 = vcmask 523264
        %v2481 = vsel %vm2480, %v2476, %v2449
        %v2482 = vsel %vm2480, %v2477, %v2451
        %v2483 = vsel %vm2480, %v2478, %v2453
        %v2484 = vsel %vm2480, %v2479, %v2455
        %vm2485 = vcmask 785408
        %v2486 = vsel %vm2485, %v2481, %v2465
        %v2487 = vsel %vm2485, %v2482, %v2467
        %v2488 = vsel %vm2485, %v2483, %v2469
        %v2489 = vsel %vm2485, %v2484, %v2471
        %v2490 = vpack.c.bf16 %v2487, %v2486
        %v2491 = vpack.c.bf16 %v2489, %v2488
        %v2492 = vlaneseq
        %v2493 = vshrl.u32 %v2492, 7
        %v2494 = vsub.s32 0, %v2493
        %v2495 = vrot.slane %v279, %v2494
        %v2512 = vunpack.c.l.b16 %v280
        %v2513 = vunpack.c.l.b16 %v282
        %v2514 = vunpack.c.l.b16 %v284
        %v2515 = vunpack.c.l.b16 %v286
        %v2516 = vunpack.c.l.b16 %v288
        %v2517 = vunpack.c.l.b16 %v290
        %v2518 = vunpack.c.l.b16 %v292
        %v2519 = vunpack.c.l.b16 %v294
        %v2520 = vunpack.c.l.b16 %v296
        %v2521 = vunpack.c.l.b16 %v298
        %v2522 = vunpack.c.l.b16 %v300
        %v2523 = vunpack.c.l.b16 %v302
        %v2524 = vunpack.c.l.b16 %v304
        %v2525 = vunpack.c.l.b16 %v306
        %v2526 = vunpack.c.l.b16 %v308
        %v2527 = vunpack.c.l.b16 %v310
        %v2528 = vpack.c.b16 %v2513, %v2512
        %v2529 = vpack.c.b16 %v2515, %v2514
        %v2530 = vpack.c.b16 %v2517, %v2516
        %v2531 = vpack.c.b16 %v2519, %v2518
        %v2532 = vpack.c.b16 %v2521, %v2520
        %v2533 = vpack.c.b16 %v2523, %v2522
        %v2534 = vpack.c.b16 %v2525, %v2524
        %v2535 = vpack.c.b16 %v2527, %v2526
        %2544 = vmatprep.subr.bf16.mxu0 0
        %2545 = vmatpush1.bf16.msra.mxu0 %v2528
        %2546 = vmatprep.subr.bf16.mxu0 0
        %2547 = vmatpush1.bf16.msra.mxu0 %v2529
        %2548 = vmatprep.subr.bf16.mxu0 0
        %2549 = vmatpush1.bf16.msra.mxu0 %v2530
        %2550 = vmatprep.subr.bf16.mxu0 0
        %2551 = vmatpush1.bf16.msra.mxu0 %v2531
        %2552 = vmatprep.subr.bf16.mxu0 0
        %2553 = vmatpush1.bf16.msra.mxu0 %v2532
        %2554 = vmatprep.subr.bf16.mxu0 0
        %2555 = vmatpush1.bf16.msra.mxu0 %v2533
        %2556 = vmatprep.subr.bf16.mxu0 0
        %2557 = vmatpush1.bf16.msra.mxu0 %v2534
        %2558 = vmatprep.subr.bf16.mxu0 0
        %2559 = vmatpush1.bf16.msra.mxu0 %v2535
        %2560 = vmatprep.subr.bf16.mxu0 0
        %2561 = vmatpush1.bf16.msra.mxu0 0
        %2562 = vmatprep.subr.bf16.mxu0 0
        %2563 = vmatpush1.bf16.msra.mxu0 0
        %2564 = vmatprep.subr.bf16.mxu0 0
        %2565 = vmatpush1.bf16.msra.mxu0 0
        %2566 = vmatprep.subr.bf16.mxu0 0
        %2567 = vmatpush1.bf16.msra.mxu0 0
        %2568 = vmatprep.subr.bf16.mxu0 0
        %2569 = vmatpush1.bf16.msra.mxu0 0
        %2570 = vmatprep.subr.bf16.mxu0 0
        %2571 = vmatpush1.bf16.msra.mxu0 0
        %2572 = vmatprep.subr.bf16.mxu0 0
        %2573 = vmatpush1.bf16.msra.mxu0 0
        %2574 = vmatprep.subr.bf16.mxu0 0
        %2575 = vmatpush1.bf16.msra.mxu0 0
        %2576 = vmatprep.mubr.bf16.mxu0 0
        %2577 = vmatmul.mubr.bf16.gmra.mrb[0].mxu0 %v2490
        %v2578 = vpop.f32.mrb[0].mxu0
        %v2579 = vadd.f32 %v2495, %v2578
        %v2580 = vpop.f32.mrb[0].mxu0
        %v2581 = vpop.f32.mrb[0].mxu0
        %v2582 = vadd.f32 %v2495, %v2581
        %v2583 = vpop.f32.mrb[0].mxu0
        %2584 = vmatprep.mubr.bf16.mxu0 0
        %2585 = vmatmul.mubr.bf16.gmra.mrb[0].mxu0 %v2491
        %v2586 = vpop.f32.mrb[0].mxu0
        %v2587 = vadd.f32 %v2495, %v2586
        %v2588 = vpop.f32.mrb[0].mxu0
        %v2589 = vpop.f32.mrb[0].mxu0
        %v2590 = vadd.f32 %v2495, %v2589
        %v2591 = vpop.f32.mrb[0].mxu0
        %2592 = vdwg.mxu0
        %v2593 = vadd.f32 %v2579, %v275
        %v2594 = vadd.f32 %v2582, %v276
        %v2595 = vadd.f32 %v2587, %v277
        %v2596 = vadd.f32 %v2590, %v278
        %2597 = vadd.xlane.f32.xlu0 %v2593
        %v2598 = vpop.xlane.xlu0 %2597
        %2599 = vadd.xlane.f32.xlu0 %v2594
        %v2600 = vpop.xlane.xlu0 %2599
        %2601 = vadd.xlane.f32.xlu0 %v2595
        %v2602 = vpop.xlane.xlu0 %2601
        %2603 = vadd.xlane.f32.xlu0 %v2596
        %v2604 = vpop.xlane.xlu0 %2603
        %v2605 = vrcp.pop 128.0
        %v2606 = vmul.f32 %v2598, %v2605
        %v2607 = vmul.f32 %v2600, %v2605
        %v2608 = vmul.f32 %v2602, %v2605
        %v2609 = vmul.f32 %v2604, %v2605
        %v2610 = vmul.f32 %v2593, %v2593
        %v2611 = vmul.f32 %v2594, %v2594
        %v2612 = vmul.f32 %v2595, %v2595
        %v2613 = vmul.f32 %v2596, %v2596
        %2614 = vadd.xlane.f32.xlu0 %v2610
        %v2615 = vpop.xlane.xlu0 %2614
        %2616 = vadd.xlane.f32.xlu0 %v2611
        %v2617 = vpop.xlane.xlu0 %2616
        %2618 = vadd.xlane.f32.xlu0 %v2612
        %v2619 = vpop.xlane.xlu0 %2618
        %2620 = vadd.xlane.f32.xlu0 %v2613
        %v2621 = vpop.xlane.xlu0 %2620
        %v2622 = vmul.f32 %v2615, %v2605
        %v2623 = vmul.f32 %v2617, %v2605
        %v2624 = vmul.f32 %v2619, %v2605
        %v2625 = vmul.f32 %v2621, %v2605
        %v2626 = vmul.f32 %v2606, %v2606
        %v2627 = vmul.f32 %v2607, %v2607
        %v2628 = vmul.f32 %v2608, %v2608
        %v2629 = vmul.f32 %v2609, %v2609
        %v2630 = vsub.f32 %v2622, %v2626
        %v2631 = vsub.f32 %v2623, %v2627
        %v2632 = vsub.f32 %v2624, %v2628
        %v2633 = vsub.f32 %v2625, %v2629
        %v2634 = vsub.f32 %v2593, %v2606
        %v2635 = vsub.f32 %v2594, %v2607
        %v2636 = vsub.f32 %v2595, %v2608
        %v2637 = vsub.f32 %v2596, %v2609
        %v2638 = vadd.f32 %v2630, 1e-05
        %v2639 = vadd.f32 %v2631, 1e-05
        %v2640 = vadd.f32 %v2632, 1e-05
        %v2641 = vadd.f32 %v2633, 1e-05
        %v2642 = vrsqrt.pop %v2638
        %v2643 = vrsqrt.pop %v2639
        %v2644 = vrsqrt.pop %v2640
        %v2645 = vrsqrt.pop %v2641
        %v2646 = vmul.f32 %v2634, %v2642
        %v2647 = vmul.f32 %v2635, %v2643
        %v2648 = vmul.f32 %v2636, %v2644
        %v2649 = vmul.f32 %v2637, %v2645
        %v2650 = vlaneseq
        %v2651 = vshrl.u32 %v2650, 7
        %v2652 = vsub.s32 1, %v2651
        %v2653 = vrot.slane %v279, %v2652
        %v2654 = vmul.f32 %v2646, %v2653
        %v2655 = vmul.f32 %v2647, %v2653
        %v2656 = vmul.f32 %v2648, %v2653
        %v2657 = vmul.f32 %v2649, %v2653
        %v2658 = vlaneseq
        %v2659 = vshrl.u32 %v2658, 7
        %v2660 = vsub.s32 2, %v2659
        %v2661 = vrot.slane %v279, %v2660
        %v2662 = vadd.f32 %v2654, %v2661
        %v2663 = vadd.f32 %v2655, %v2661
        %v2664 = vadd.f32 %v2656, %v2661
        %v2665 = vadd.f32 %v2657, %v2661
        %v2666 = vpack.c.bf16 %v2663, %v2662
        %v2667 = vpack.c.bf16 %v2665, %v2664
        %v2668 = vlaneseq
        %v2669 = vshrl.u32 %v2668, 7
        %v2670 = vsub.s32 3, %v2669
        %v2671 = vrot.slane %v279, %v2670
        %v2672 = vunpack.c.h.b16 %v280
        %v2673 = vunpack.c.h.b16 %v282
        %v2674 = vunpack.c.h.b16 %v284
        %v2675 = vunpack.c.h.b16 %v286
        %v2676 = vunpack.c.h.b16 %v288
        %v2677 = vunpack.c.h.b16 %v290
        %v2678 = vunpack.c.h.b16 %v292
        %v2679 = vunpack.c.h.b16 %v294
        %v2680 = vunpack.c.h.b16 %v296
        %v2681 = vunpack.c.h.b16 %v298
        %v2682 = vunpack.c.h.b16 %v300
        %v2683 = vunpack.c.h.b16 %v302
        %v2684 = vunpack.c.h.b16 %v304
        %v2685 = vunpack.c.h.b16 %v306
        %v2686 = vunpack.c.h.b16 %v308
        %v2687 = vunpack.c.h.b16 %v310
        %v2688 = vpack.c.b16 %v2673, %v2672
        %v2689 = vpack.c.b16 %v2675, %v2674
        %v2690 = vpack.c.b16 %v2677, %v2676
        %v2691 = vpack.c.b16 %v2679, %v2678
        %v2692 = vpack.c.b16 %v2681, %v2680
        %v2693 = vpack.c.b16 %v2683, %v2682
        %v2694 = vpack.c.b16 %v2685, %v2684
        %v2695 = vpack.c.b16 %v2687, %v2686
        %2704 = vmatprep.subr.bf16.mxu0 0
        %2705 = vmatpush1.bf16.msra.mxu0 %v2688
        %2706 = vmatprep.subr.bf16.mxu0 0
        %2707 = vmatpush1.bf16.msra.mxu0 %v2689
        %2708 = vmatprep.subr.bf16.mxu0 0
        %2709 = vmatpush1.bf16.msra.mxu0 %v2690
        %2710 = vmatprep.subr.bf16.mxu0 0
        %2711 = vmatpush1.bf16.msra.mxu0 %v2691
        %2712 = vmatprep.subr.bf16.mxu0 0
        %2713 = vmatpush1.bf16.msra.mxu0 %v2692
        %2714 = vmatprep.subr.bf16.mxu0 0
        %2715 = vmatpush1.bf16.msra.mxu0 %v2693
        %2716 = vmatprep.subr.bf16.mxu0 0
        %2717 = vmatpush1.bf16.msra.mxu0 %v2694
        %2718 = vmatprep.subr.bf16.mxu0 0
        %2719 = vmatpush1.bf16.msra.mxu0 %v2695
        %2720 = vmatprep.subr.bf16.mxu0 0
        %2721 = vmatpush1.bf16.msra.mxu0 0
        %2722 = vmatprep.subr.bf16.mxu0 0
        %2723 = vmatpush1.bf16.msra.mxu0 0
        %2724 = vmatprep.subr.bf16.mxu0 0
        %2725 = vmatpush1.bf16.msra.mxu0 0
        %2726 = vmatprep.subr.bf16.mxu0 0
        %2727 = vmatpush1.bf16.msra.mxu0 0
        %2728 = vmatprep.subr.bf16.mxu0 0
        %2729 = vmatpush1.bf16.msra.mxu0 0
        %2730 = vmatprep.subr.bf16.mxu0 0
        %2731 = vmatpush1.bf16.msra.mxu0 0
        %2732 = vmatprep.subr.bf16.mxu0 0
        %2733 = vmatpush1.bf16.msra.mxu0 0
        %2734 = vmatprep.subr.bf16.mxu0 0
        %2735 = vmatpush1.bf16.msra.mxu0 0
        %2736 = vmatprep.mubr.bf16.mxu0 0
        %2737 = vmatmul.mubr.bf16.gmra.mrb[0].mxu0 %v2666
        %v2738 = vpop.f32.mrb[0].mxu0
        %v2739 = vadd.f32 %v2671, %v2738
        %v2740 = vpop.f32.mrb[0].mxu0
        %v2741 = vpop.f32.mrb[0].mxu0
        %v2742 = vadd.f32 %v2671, %v2741
        %v2743 = vpop.f32.mrb[0].mxu0
        %2744 = vmatprep.mubr.bf16.mxu0 0
        %2745 = vmatmul.mubr.bf16.gmra.mrb[0].mxu0 %v2667
        %v2746 = vpop.f32.mrb[0].mxu0
        %v2747 = vadd.f32 %v2671, %v2746
        %v2748 = vpop.f32.mrb[0].mxu0
        %v2749 = vpop.f32.mrb[0].mxu0
        %v2750 = vadd.f32 %v2671, %v2749
        %v2751 = vpop.f32.mrb[0].mxu0
        %2752 = vdwg.mxu0
        %v2753 = vmax.f32 %v2739, 0.0
        %v2754 = vmax.f32 %v2742, 0.0
        %v2755 = vmax.f32 %v2747, 0.0
        %v2756 = vmax.f32 %v2750, 0.0
        %v2757 = vpack.c.bf16 %v2754, %v2753
        %v2758 = vpack.c.bf16 %v2756, %v2755
        %v2759 = vlaneseq
        %v2760 = vshrl.u32 %v2759, 7
        %v2761 = vsub.s32 4, %v2760
        %v2762 = vrot.slane %v279, %v2761
        %v2779 = vunpack.c.l.b16 %v281
        %v2780 = vunpack.c.l.b16 %v283
        %v2781 = vunpack.c.l.b16 %v285
        %v2782 = vunpack.c.l.b16 %v287
        %v2783 = vunpack.c.l.b16 %v289
        %v2784 = vunpack.c.l.b16 %v291
        %v2785 = vunpack.c.l.b16 %v293
        %v2786 = vunpack.c.l.b16 %v295
        %v2787 = vunpack.c.l.b16 %v297
        %v2788 = vunpack.c.l.b16 %v299
        %v2789 = vunpack.c.l.b16 %v301
        %v2790 = vunpack.c.l.b16 %v303
        %v2791 = vunpack.c.l.b16 %v305
        %v2792 = vunpack.c.l.b16 %v307
        %v2793 = vunpack.c.l.b16 %v309
        %v2794 = vunpack.c.l.b16 %v311
        %v2795 = vpack.c.b16 %v2780, %v2779
        %v2796 = vpack.c.b16 %v2782, %v2781
        %v2797 = vpack.c.b16 %v2784, %v2783
        %v2798 = vpack.c.b16 %v2786, %v2785
        %v2799 = vpack.c.b16 %v2788, %v2787
        %v2800 = vpack.c.b16 %v2790, %v2789
        %v2801 = vpack.c.b16 %v2792, %v2791
        %v2802 = vpack.c.b16 %v2794, %v2793
        %2811 = vmatprep.subr.bf16.mxu0 0
        %2812 = vmatpush1.bf16.msra.mxu0 %v2795
        %2813 = vmatprep.subr.bf16.mxu0 0
        %2814 = vmatpush1.bf16.msra.mxu0 %v2796
        %2815 = vmatprep.subr.bf16.mxu0 0
        %2816 = vmatpush1.bf16.msra.mxu0 %v2797
        %2817 = vmatprep.subr.bf16.mxu0 0
        %2818 = vmatpush1.bf16.msra.mxu0 %v2798
        %2819 = vmatprep.subr.bf16.mxu0 0
        %2820 = vmatpush1.bf16.msra.mxu0 %v2799
        %2821 = vmatprep.subr.bf16.mxu0 0
        %2822 = vmatpush1.bf16.msra.mxu0 %v2800
        %2823 = vmatprep.subr.bf16.mxu0 0
        %2824 = vmatpush1.bf16.msra.mxu0 %v2801
        %2825 = vmatprep.subr.bf16.mxu0 0
        %2826 = vmatpush1.bf16.msra.mxu0 %v2802
        %2827 = vmatprep.subr.bf16.mxu0 0
        %2828 = vmatpush1.bf16.msra.mxu0 0
        %2829 = vmatprep.subr.bf16.mxu0 0
        %2830 = vmatpush1.bf16.msra.mxu0 0
        %2831 = vmatprep.subr.bf16.mxu0 0
        %2832 = vmatpush1.bf16.msra.mxu0 0
        %2833 = vmatprep.subr.bf16.mxu0 0
        %2834 = vmatpush1.bf16.msra.mxu0 0
        %2835 = vmatprep.subr.bf16.mxu0 0
        %2836 = vmatpush1.bf16.msra.mxu0 0
        %2837 = vmatprep.subr.bf16.mxu0 0
        %2838 = vmatpush1.bf16.msra.mxu0 0
        %2839 = vmatprep.subr.bf16.mxu0 0
        %2840 = vmatpush1.bf16.msra.mxu0 0
        %2841 = vmatprep.subr.bf16.mxu0 0
        %2842 = vmatpush1.bf16.msra.mxu0 0
        %2843 = vmatprep.mubr.bf16.mxu0 0
        %2844 = vmatmul.mubr.bf16.gmra.mrb[0].mxu0 %v2757
        %v2845 = vpop.f32.mrb[0].mxu0
        %v2846 = vadd.f32 %v2762, %v2845
        %v2847 = vpop.f32.mrb[0].mxu0
        %v2848 = vpop.f32.mrb[0].mxu0
        %v2849 = vadd.f32 %v2762, %v2848
        %v2850 = vpop.f32.mrb[0].mxu0
        %2851 = vmatprep.mubr.bf16.mxu0 0
        %2852 = vmatmul.mubr.bf16.gmra.mrb[0].mxu0 %v2758
        %v2853 = vpop.f32.mrb[0].mxu0
        %v2854 = vadd.f32 %v2762, %v2853
        %v2855 = vpop.f32.mrb[0].mxu0
        %v2856 = vpop.f32.mrb[0].mxu0
        %v2857 = vadd.f32 %v2762, %v2856
        %v2858 = vpop.f32.mrb[0].mxu0
        %2859 = vdwg.mxu0
        %v2860 = vadd.f32 %v2846, %v2662
        %v2861 = vadd.f32 %v2849, %v2663
        %v2862 = vadd.f32 %v2854, %v2664
        %v2863 = vadd.f32 %v2857, %v2665
        %2864 = vadd.xlane.f32.xlu0 %v2860
        %v2865 = vpop.xlane.xlu0 %2864
        %2866 = vadd.xlane.f32.xlu0 %v2861
        %v2867 = vpop.xlane.xlu0 %2866
        %2868 = vadd.xlane.f32.xlu0 %v2862
        %v2869 = vpop.xlane.xlu0 %2868
        %2870 = vadd.xlane.f32.xlu0 %v2863
        %v2871 = vpop.xlane.xlu0 %2870
        %v2872 = vmul.f32 %v2865, %v2605
        %v2873 = vmul.f32 %v2867, %v2605
        %v2874 = vmul.f32 %v2869, %v2605
        %v2875 = vmul.f32 %v2871, %v2605
        %v2876 = vmul.f32 %v2860, %v2860
        %v2877 = vmul.f32 %v2861, %v2861
        %v2878 = vmul.f32 %v2862, %v2862
        %v2879 = vmul.f32 %v2863, %v2863
        %2880 = vadd.xlane.f32.xlu0 %v2876
        %v2881 = vpop.xlane.xlu0 %2880
        %2882 = vadd.xlane.f32.xlu0 %v2877
        %v2883 = vpop.xlane.xlu0 %2882
        %2884 = vadd.xlane.f32.xlu0 %v2878
        %v2885 = vpop.xlane.xlu0 %2884
        %2886 = vadd.xlane.f32.xlu0 %v2879
        %v2887 = vpop.xlane.xlu0 %2886
        %v2888 = vmul.f32 %v2881, %v2605
        %v2889 = vmul.f32 %v2883, %v2605
        %v2890 = vmul.f32 %v2885, %v2605
        %v2891 = vmul.f32 %v2887, %v2605
        %v2892 = vmul.f32 %v2872, %v2872
        %v2893 = vmul.f32 %v2873, %v2873
        %v2894 = vmul.f32 %v2874, %v2874
        %v2895 = vmul.f32 %v2875, %v2875
        %v2896 = vsub.f32 %v2888, %v2892
        %v2897 = vsub.f32 %v2889, %v2893
        %v2898 = vsub.f32 %v2890, %v2894
        %v2899 = vsub.f32 %v2891, %v2895
        %v2900 = vsub.f32 %v2860, %v2872
        %v2901 = vsub.f32 %v2861, %v2873
        %v2902 = vsub.f32 %v2862, %v2874
        %v2903 = vsub.f32 %v2863, %v2875
        %v2904 = vadd.f32 %v2896, 1e-05
        %v2905 = vadd.f32 %v2897, 1e-05
        %v2906 = vadd.f32 %v2898, 1e-05
        %v2907 = vadd.f32 %v2899, 1e-05
        %v2908 = vrsqrt.pop %v2904
        %v2909 = vrsqrt.pop %v2905
        %v2910 = vrsqrt.pop %v2906
        %v2911 = vrsqrt.pop %v2907
        %v2912 = vmul.f32 %v2900, %v2908
        %v2913 = vmul.f32 %v2901, %v2909
        %v2914 = vmul.f32 %v2902, %v2910
        %v2915 = vmul.f32 %v2903, %v2911
        %v2916 = vlaneseq
        %v2917 = vshrl.u32 %v2916, 7
        %v2918 = vsub.s32 5, %v2917
        %v2919 = vrot.slane %v279, %v2918
        %v2920 = vmul.f32 %v2912, %v2919
        %v2921 = vmul.f32 %v2913, %v2919
        %v2922 = vmul.f32 %v2914, %v2919
        %v2923 = vmul.f32 %v2915, %v2919
        %v2924 = vlaneseq
        %v2925 = vshrl.u32 %v2924, 7
        %v2926 = vsub.s32 6, %v2925
        %v2927 = vrot.slane %v279, %v2926
        %v2928 = vadd.f32 %v2920, %v2927
        %v2929 = vadd.f32 %v2921, %v2927
        %v2930 = vadd.f32 %v2922, %v2927
        %v2931 = vadd.f32 %v2923, %v2927
        %2932 = vst [vmem:[%s271] sm:$0xff] %v2928
        %2933 = vst [vmem:[%s271 + $0x8] sm:$0xff] %v2929
        %2934 = vst [vmem:[%s271 + $0x10] sm:$0xff] %v2930
        %2935 = vst [vmem:[%s271 + $0x18] sm:$0xff] %v2931
        %s2936 = sand.u32 %s141, 1
        %s2937 = scalar_lea.sflag [#allocation4], %s2936
        %s2938 = sand.u32 %s141, 1
        %s2939 = smul.addr %s2938, 32
        %s2940 = scalar_lea.vmem [#allocation8], %s2939
        // Predicated region
        $region53: #{tpu_custom_call.1} parent=39 // pred_check
          %p2941 = pneg %p151
        $region54: #{tpu_custom_call.1} parent=39 // pred_check_branch
          %2943 = sbr.rel (%p2941) target = $region56
        $region55: #{tpu_custom_call.1} parent=39 // pred_region
          %s2944 = smul.u32 4, %s23
          %s2946 = ssub.s32 512, 512
          %2947 = vsyncadd %s2937, %s2946
          %s2948 = smul.addr %s2944, 128
          %s2949 = scalar_lea.hbm %s5, %s2948
          %s2950 = sshll.u32 %s2940, 4
          %s2951 = int_to_ptr.vmem [resolvable:$true] %s2950
          %2956 = dma.vmem_to_hbm [thread:$0]  %s2951, 512, %s2949, %s2937, 128, 128, 8
        $region56: #{tpu_custom_call.1} parent=39 // pred_fallthru
          _
      $region40: #{tpu_custom_call.1} parent=5 // pred_fallthru
        _
      %p2957 = scmp.le.s32.totalorder 2, %s18
      // Predicated region
      $region57: #{tpu_custom_call.1} parent=5 // pred_check
        %p2958 = pneg %p2957
      $region58: #{tpu_custom_call.1} parent=5 // pred_check_branch
        %2960 = sbr.rel (%p2958) target = $region60
      $region59: #{tpu_custom_call.1} parent=5 // pred_region
        %s2961 = ssub.s32 %s18, 2
        // Predicated region
        $region61: #{tpu_custom_call.1} parent=59 // pred_check
          %p2962 = pneg %p157
        $region62: #{tpu_custom_call.1} parent=59 // pred_check_branch
          %2964 = sbr.rel (%p2962) target = $region64
        $region63: #{tpu_custom_call.1} parent=59 // pred_region
          %s2965 = sand.u32 %s142, 1
          %s2966 = scalar_lea.sflag [#allocation4], %s2965
          %s2967 = sand.u32 %s142, 1
          %s2968 = smul.addr %s2967, 32
          %s2969 = scalar_lea.vmem [#allocation8], %s2968
          %2970 = dma.done %s2966, 512
        $region64: #{tpu_custom_call.1} parent=59 // pred_fallthru
          _
      $region60: #{tpu_custom_call.1} parent=5 // pred_fallthru
        _
    $region6: #{tpu_custom_call.1} parent=1 // loop_footer
      %s22 = sadd.s32 1, %s18
    $region7: #{tpu_custom_call.1} parent=1 // loop_footer_branch
      %17 = sbr.rel target = $region3
    $region8: #{tpu_custom_call.1} parent=1 // loop_exit
      _
    %2971 = vsyncpa [#allocation3], 1
    %s2972 = scalar_lea.sflag [#allocation3], 1
    %2973 = vsyncpa %s2972, 1
    %2974 = vsyncpa [#allocation6], 1
    %2975 = vsyncpa [#allocation4], 1
    %s2976 = scalar_lea.sflag [#allocation4], 1
    %2977 = vsyncpa %s2976, 1

</llo_original>
